<compile_context>
chip_gen: v5e
topology: v5e:2x2
jax: 0.10.0
libtpu: 0.0.40
codegen_flags: <defaults>
</compile_context>

<pallas_src>
import math
import jax
import jax.numpy as jnp
from jax.experimental import pallas as pl
from jax.experimental.pallas import tpu as pltpu

# ---- model dims (small, consistent with the module) ----
B = 2            # batch
S = 8            # sequence length (tokens)
D = 32           # num_hiddens
NUM_HEADS = 4
HEAD_DIM = D // NUM_HEADS
MLP = 64         # mlp_hiddens
LN_EPS = 1e-5
VEC_W = 128      # lane-dense width of the packed bias rows


def _normalize(v):
    """LayerNorm WITHOUT the affine part (gamma/beta are folded into weights)."""
    mu = jnp.mean(v, axis=-1, keepdims=True)
    var = jnp.mean((v - mu) ** 2, axis=-1, keepdims=True)
    return (v - mu) * jax.lax.rsqrt(var + LN_EPS)


def transformer_block_kernel(
    x_ref,        # (B, S, D)
    wattn_ref,    # (D, 4D) = [g1*wq_t | g1*wk_t | g1*wv_t | wh_t]  (128 lanes)
    w1_ref,       # (D, MLP)  = g2 * W1
    w2_ref,       # (MLP, D)
    vec_ref,      # (4, 128) packed rows: b_qkv(96), b_h(32), b_1(64), b_2(32)
    o_ref,        # (B, S, D)
):
    Bx, Sx, Dx = x_ref.shape
    N = Bx * Sx

    # Leading-dim-only reshape -> free.
    x = x_ref[...].astype(jnp.float32).reshape(N, Dx)

    b_qkv = vec_ref[0, :]          # (128,)  last Dx lanes are zero / ignored
    b_h = vec_ref[1, :Dx]
    b_1 = vec_ref[2, :MLP]
    b_2 = vec_ref[3, :Dx]

    # ---- sub-block 1: x + MHSA(LN1(x)) ----
    xn = _normalize(x)
    # One full 128-lane MXU push; lanes 96:128 of the product are ignored.
    qkv = jnp.dot(xn, wattn_ref[...], preferred_element_type=jnp.float32) + b_qkv

    def to_heads(t):   # (N, D) -> (B*H, S, dh); last dim stays minor -> cheap
        return (t.reshape(Bx, Sx, NUM_HEADS, HEAD_DIM)
                 .transpose(0, 2, 1, 3)
                 .reshape(Bx * NUM_HEADS, Sx, HEAD_DIM))

    q = to_heads(qkv[:, 0:Dx])            # slices taken from the result, not
    k = to_heads(qkv[:, Dx:2 * Dx])       # from the weight operand
    v = to_heads(qkv[:, 2 * Dx:3 * Dx])

    inv_sqrt_d = 1.0 / math.sqrt(HEAD_DIM)
    # All heads in a single batched einsum + one softmax + one batched einsum.
    s = jnp.einsum("gqd,gkd->gqk", q, k,
                   preferred_element_type=jnp.float32) * inv_sqrt_d
    s = s - jnp.max(s, axis=-1, keepdims=True)
    e = jnp.exp(s)
    p = e / jnp.sum(e, axis=-1, keepdims=True)     # exact divide (EUP idle here)
    ctx = jnp.einsum("gqk,gkd->gqd", p, v,
                     preferred_element_type=jnp.float32)   # (B*H, S, dh)

    # Concatenated head output as a value (no VMEM scratch round-trip).
    hcat = (ctx.reshape(Bx, NUM_HEADS, Sx, HEAD_DIM)
               .transpose(0, 2, 1, 3)
               .reshape(N, Dx))

    attn = jnp.dot(hcat, wattn_ref[:, 3 * Dx:],
                   preferred_element_type=jnp.float32) + b_h
    x1 = x + attn

    # ---- sub-block 2: x1 + MLP(LN2(x1)) ----
    xn2 = _normalize(x1)
    h1 = jnp.dot(xn2, w1_ref[...], preferred_element_type=jnp.float32) + b_1
    # exact GELU (matches nn.GELU default): 0.5*x*(1+erf(x/sqrt(2)))
    h1 = 0.5 * h1 * (1.0 + jax.lax.erf(h1 * (1.0 / math.sqrt(2.0))))
    mlp_out = jnp.dot(h1, w2_ref[...], preferred_element_type=jnp.float32) + b_2

    o_ref[...] = (x1 + mlp_out).reshape(Bx, Sx, Dx).astype(o_ref.dtype)


def prepare_params(p):
    """One-time parameter prep (outside the hot path):
    fuse Q/K/V/W_h weights, fold LN1 gamma/beta into W_qkv / qkv-bias and
    LN2 gamma/beta into W1 / b1, and pack all bias vectors into one lane-dense
    (4, 128) array."""
    g1, be1 = p["g1"][0], p["be1"][0]
    g2, be2 = p["g2"][0], p["be2"][0]

    w_qkv = jnp.concatenate([p["wq_t"], p["wk_t"], p["wv_t"]], axis=1)   # (D, 3D)
    w_attn = jnp.concatenate([g1[:, None] * w_qkv, p["wh_t"]], axis=1)   # (D, 4D)

    b_qkv = be1 @ w_qkv                        # (3D,)  folded LN1 beta
    w_1 = g2[:, None] * p["w1_t"]              # (D, MLP) folded LN2 gamma
    b_1 = be2 @ p["w1_t"] + p["b1"][0]         # (MLP,)  folded LN2 beta

    def row(v):
        return jnp.pad(v, (0, VEC_W - v.shape[0]))[None, :]

    vec = jnp.concatenate(
        [row(b_qkv), row(p["bh"][0]), row(b_1), row(p["b2"][0])], axis=0)  # (4,128)

    return {"w_attn": w_attn, "w1": w_1, "w2": p["w2_t"], "vec": vec}


@jax.jit
def transformer_block(x, packed):
    Bx, Sx, Dx = x.shape
    vmem = pl.BlockSpec(memory_space=pltpu.MemorySpace.VMEM)
    return pl.pallas_call(
        transformer_block_kernel,
        out_shape=jax.ShapeDtypeStruct((Bx, Sx, Dx), x.dtype),
        in_specs=[vmem, vmem, vmem, vmem, vmem],
        out_specs=vmem,
    )(x, packed["w_attn"], packed["w1"], packed["w2"], packed["vec"])


def reference_block(x, p):
    """Pure-JAX reference mirroring the PyTorch module (eval mode, unfolded)."""
    def ln(v, g, b):
        mu = jnp.mean(v, axis=-1, keepdims=True)
        var = jnp.mean((v - mu) ** 2, axis=-1, keepdims=True)
        return (v - mu) * jax.lax.rsqrt(var + LN_EPS) * g + b

    xn = ln(x, p["g1"][0], p["be1"][0])
    q = xn @ p["wq_t"]
    k = xn @ p["wk_t"]
    v = xn @ p["wv_t"]

    def split(t):  # (B,S,D) -> (B,H,S,dh)
        return t.reshape(t.shape[0], t.shape[1], NUM_HEADS, HEAD_DIM).transpose(0, 2, 1, 3)

    qh, kh, vh = split(q), split(k), split(v)
    scores = jnp.einsum("bhqd,bhkd->bhqk", qh, kh) / math.sqrt(HEAD_DIM)
    a = jax.nn.softmax(scores, axis=-1)
    hh = jnp.einsum("bhqk,bhkd->bhqd", a, vh)
    hcat = hh.transpose(0, 2, 1, 3).reshape(x.shape[0], x.shape[1], D)
    attn = hcat @ p["wh_t"] + p["bh"][0]
    x1 = x + attn
    xn2 = ln(x1, p["g2"][0], p["be2"][0])
    h1 = xn2 @ p["w1_t"] + p["b1"][0]
    h1 = 0.5 * h1 * (1.0 + jax.lax.erf(h1 / math.sqrt(2.0)))
    return x1 + (h1 @ p["w2_t"] + p["b2"][0])


def make_params(key):
    ks = jax.random.split(key, 12)
    scale = 0.08
    # Non-trivial LN gamma/beta so the weight-folding path is actually exercised.
    return {
        "g1": 1.0 + 0.1 * jax.random.normal(ks[8], (1, D), jnp.float32),
        "be1": 0.1 * jax.random.normal(ks[9], (1, D), jnp.float32),
        "wq_t": jax.random.normal(ks[0], (D, D), jnp.float32) * scale,
        "wk_t": jax.random.normal(ks[1], (D, D), jnp.float32) * scale,
        "wv_t": jax.random.normal(ks[2], (D, D), jnp.float32) * scale,
        "wh_t": jax.random.normal(ks[3], (D, D), jnp.float32) * scale,
        "bh": jax.random.normal(ks[4], (1, D), jnp.float32) * scale,
        "g2": 1.0 + 0.1 * jax.random.normal(ks[10], (1, D), jnp.float32),
        "be2": 0.1 * jax.random.normal(ks[11], (1, D), jnp.float32),
        "w1_t": jax.random.normal(ks[5], (D, MLP), jnp.float32) * scale,
        "b1": jax.random.normal(ks[6], (1, MLP), jnp.float32) * scale,
        "w2_t": jax.random.normal(ks[7], (MLP, D), jnp.float32) * scale,
        "b2": jnp.zeros((1, D), jnp.float32),
    }


if __name__ == "__main__":
    key = jax.random.PRNGKey(0)
    kx, kp = jax.random.split(key)
    x = jax.random.normal(kx, (B, S, D), jnp.float32)
    params = make_params(kp)

    # One-time parameter fusion/packing, outside the per-call path.
    packed = prepare_params(params)

    out = jax.block_until_ready(transformer_block(x, packed))
    ref = reference_block(x, params)

    assert out.shape == (B, S, D)
    # Exact softmax divide (no approx reciprocal); remaining delta is MXU
    # default-precision rounding + LN-affine folding reassociation.
    assert jnp.allclose(out, ref, atol=2e-4, rtol=2e-4), (
        f"max abs err {jnp.max(jnp.abs(out - ref))}"
    )
    print("KERNEL_OK")
</pallas_src>

<mosaic_0001>
module attributes {stable_mosaic.version = 11 : i64} {
  func.func @transformer_block_kernel(%arg0: memref<2x8x32xf32, #tpu.memory_space<vmem>>, %arg1: memref<32x128xf32, #tpu.memory_space<vmem>>, %arg2: memref<32x64xf32, #tpu.memory_space<vmem>>, %arg3: memref<64x32xf32, #tpu.memory_space<vmem>>, %arg4: memref<4x128xf32, #tpu.memory_space<vmem>>, %arg5: memref<2x8x32xf32, #tpu.memory_space<vmem>>) attributes {dimension_semantics = [], scalar_prefetch = 0 : i64, scratch_operands = 0 : i64, tpu.core_type = #tpu.core_type<tc>} {
    %c0 = arith.constant 0 : index
    %c0_0 = arith.constant 0 : index
    %c0_1 = arith.constant 0 : index
    %0 = vector.load %arg0[%c0, %c0_0, %c0_1] : memref<2x8x32xf32, #tpu.memory_space<vmem>>, vector<2x8x32xf32>
    %1 = vector.shape_cast %0 : vector<2x8x32xf32> to vector<16x32xf32>
    %c0_2 = arith.constant 0 : index
    %c0_3 = arith.constant 0 : index
    %2 = vector.load %arg4[%c0_2, %c0_3] : memref<4x128xf32, #tpu.memory_space<vmem>>, vector<1x128xf32>
    %3 = vector.shape_cast %2 : vector<1x128xf32> to vector<128xf32>
    %c1 = arith.constant 1 : index
    %c0_4 = arith.constant 0 : index
    %4 = vector.load %arg4[%c1, %c0_4] : memref<4x128xf32, #tpu.memory_space<vmem>>, vector<1x32xf32>
    %5 = vector.shape_cast %4 : vector<1x32xf32> to vector<32xf32>
    %c2 = arith.constant 2 : index
    %c0_5 = arith.constant 0 : index
    %6 = vector.load %arg4[%c2, %c0_5] : memref<4x128xf32, #tpu.memory_space<vmem>>, vector<1x64xf32>
    %7 = vector.shape_cast %6 : vector<1x64xf32> to vector<64xf32>
    %c3 = arith.constant 3 : index
    %c0_6 = arith.constant 0 : index
    %8 = vector.load %arg4[%c3, %c0_6] : memref<4x128xf32, #tpu.memory_space<vmem>>, vector<1x32xf32>
    %9 = vector.shape_cast %8 : vector<1x32xf32> to vector<32xf32>
    %cst = arith.constant dense<0.000000e+00> : vector<16xf32>
    %10 = vector.multi_reduction <add>, %1, %cst [1] : vector<16x32xf32> to vector<16xf32>
    %11 = vector.shape_cast %10 : vector<16xf32> to vector<16x1xf32>
    %cst_7 = arith.constant 3.200000e+01 : f32
    %12 = vector.broadcast %cst_7 : f32 to vector<16x1xf32>
    %13 = arith.divf %11, %12 : vector<16x1xf32>
    %14 = vector.broadcast %13 : vector<16x1xf32> to vector<16x32xf32>
    %15 = arith.subf %1, %14 : vector<16x32xf32>
    %16 = arith.mulf %15, %15 : vector<16x32xf32>
    %cst_8 = arith.constant dense<0.000000e+00> : vector<16xf32>
    %17 = vector.multi_reduction <add>, %16, %cst_8 [1] : vector<16x32xf32> to vector<16xf32>
    %18 = vector.shape_cast %17 : vector<16xf32> to vector<16x1xf32>
    %cst_9 = arith.constant 3.200000e+01 : f32
    %19 = vector.broadcast %cst_9 : f32 to vector<16x1xf32>
    %20 = arith.divf %18, %19 : vector<16x1xf32>
    %21 = vector.broadcast %13 : vector<16x1xf32> to vector<16x32xf32>
    %22 = arith.subf %1, %21 : vector<16x32xf32>
    %cst_10 = arith.constant 9.99999974E-6 : f32
    %23 = vector.broadcast %cst_10 : f32 to vector<16x1xf32>
    %24 = arith.addf %20, %23 : vector<16x1xf32>
    %25 = math.rsqrt %24 : vector<16x1xf32>
    %26 = vector.broadcast %25 : vector<16x1xf32> to vector<16x32xf32>
    %27 = arith.mulf %22, %26 : vector<16x32xf32>
    %c0_11 = arith.constant 0 : index
    %c0_12 = arith.constant 0 : index
    %28 = vector.load %arg1[%c0_11, %c0_12] : memref<32x128xf32, #tpu.memory_space<vmem>>, vector<32x128xf32>
    %cst_13 = arith.constant dense<0.000000e+00> : vector<16x128xf32>
    %29 = tpu.matmul %27, %28, %cst_13 {dimension_numbers = #tpu.dot_dimension_numbers<[1], [0], [0], [1], [0, 0, 1, 1], [], []>} : vector<16x32xf32>, vector<32x128xf32>, vector<16x128xf32> -> vector<16x128xf32>
    %30 = vector.shape_cast %3 : vector<128xf32> to vector<1x128xf32>
    %31 = vector.broadcast %30 : vector<1x128xf32> to vector<16x128xf32>
    %32 = arith.addf %29, %31 : vector<16x128xf32>
    %33 = vector.extract_strided_slice %32 {offsets = [0, 0], sizes = [16, 32], strides = [1, 1]} : vector<16x128xf32> to vector<16x32xf32>
    %34 = vector.shape_cast %33 : vector<16x32xf32> to vector<2x8x4x8xf32>
    %35 = tpu.transpose %34, [0, 2, 1, 3] : vector<2x8x4x8xf32> -> vector<2x4x8x8xf32>
    %36 = vector.shape_cast %35 : vector<2x4x8x8xf32> to vector<8x8x8xf32>
    %37 = vector.extract_strided_slice %32 {offsets = [0, 32], sizes = [16, 32], strides = [1, 1]} : vector<16x128xf32> to vector<16x32xf32>
    %38 = vector.shape_cast %37 : vector<16x32xf32> to vector<2x8x4x8xf32>
    %39 = tpu.transpose %38, [0, 2, 1, 3] : vector<2x8x4x8xf32> -> vector<2x4x8x8xf32>
    %40 = vector.shape_cast %39 : vector<2x4x8x8xf32> to vector<8x8x8xf32>
    %41 = vector.extract_strided_slice %32 {offsets = [0, 64], sizes = [16, 32], strides = [1, 1]} : vector<16x128xf32> to vector<16x32xf32>
    %42 = vector.shape_cast %41 : vector<16x32xf32> to vector<2x8x4x8xf32>
    %43 = tpu.transpose %42, [0, 2, 1, 3] : vector<2x8x4x8xf32> -> vector<2x4x8x8xf32>
    %44 = vector.shape_cast %43 : vector<2x4x8x8xf32> to vector<8x8x8xf32>
    "tpu.trace_start"() <{level = 10 : i32, message = "gqd,gkd->gqk"}> : () -> ()
    %cst_14 = arith.constant dense<0.000000e+00> : vector<8x8x8xf32>
    %45 = tpu.matmul %36, %40, %cst_14 {dimension_numbers = #tpu.dot_dimension_numbers<[2], [2], [1], [1], [0, 0, 0, 1, 1, 1], [0], [0]>} : vector<8x8x8xf32>, vector<8x8x8xf32>, vector<8x8x8xf32> -> vector<8x8x8xf32>
    "tpu.trace_stop"() : () -> ()
    %cst_15 = arith.constant 0.353553385 : f32
    %46 = vector.broadcast %cst_15 : f32 to vector<8x8x8xf32>
    %47 = arith.mulf %45, %46 : vector<8x8x8xf32>
    %cst_16 = arith.constant dense<0xFF800000> : vector<8x8xf32>
    %48 = vector.multi_reduction <maximumf>, %47, %cst_16 [2] : vector<8x8x8xf32> to vector<8x8xf32>
    %49 = vector.shape_cast %48 : vector<8x8xf32> to vector<8x8x1xf32>
    %50 = vector.broadcast %49 : vector<8x8x1xf32> to vector<8x8x8xf32>
    %51 = arith.subf %47, %50 : vector<8x8x8xf32>
    %52 = math.exp %51 : vector<8x8x8xf32>
    %cst_17 = arith.constant dense<0.000000e+00> : vector<8x8xf32>
    %53 = vector.multi_reduction <add>, %52, %cst_17 [2] : vector<8x8x8xf32> to vector<8x8xf32>
    %54 = vector.shape_cast %53 : vector<8x8xf32> to vector<8x8x1xf32>
    %55 = vector.broadcast %54 : vector<8x8x1xf32> to vector<8x8x8xf32>
    %56 = arith.divf %52, %55 : vector<8x8x8xf32>
    "tpu.trace_start"() <{level = 10 : i32, message = "gqk,gkd->gqd"}> : () -> ()
    %cst_18 = arith.constant dense<0.000000e+00> : vector<8x8x8xf32>
    %57 = tpu.matmul %56, %44, %cst_18 {dimension_numbers = #tpu.dot_dimension_numbers<[2], [1], [1], [2], [0, 0, 0, 1, 1, 2], [0], [0]>} : vector<8x8x8xf32>, vector<8x8x8xf32>, vector<8x8x8xf32> -> vector<8x8x8xf32>
    "tpu.trace_stop"() : () -> ()
    %58 = vector.shape_cast %57 : vector<8x8x8xf32> to vector<2x4x8x8xf32>
    %59 = tpu.transpose %58, [0, 2, 1, 3] : vector<2x4x8x8xf32> -> vector<2x8x4x8xf32>
    %60 = vector.shape_cast %59 : vector<2x8x4x8xf32> to vector<16x32xf32>
    %c0_19 = arith.constant 0 : index
    %c96 = arith.constant 96 : index
    %61 = vector.load %arg1[%c0_19, %c96] : memref<32x128xf32, #tpu.memory_space<vmem>>, vector<32x32xf32>
    %cst_20 = arith.constant dense<0.000000e+00> : vector<16x32xf32>
    %62 = tpu.matmul %60, %61, %cst_20 {dimension_numbers = #tpu.dot_dimension_numbers<[1], [0], [0], [1], [0, 0, 1, 1], [], []>} : vector<16x32xf32>, vector<32x32xf32>, vector<16x32xf32> -> vector<16x32xf32>
    %63 = vector.shape_cast %5 : vector<32xf32> to vector<1x32xf32>
    %64 = vector.broadcast %63 : vector<1x32xf32> to vector<16x32xf32>
    %65 = arith.addf %62, %64 : vector<16x32xf32>
    %66 = arith.addf %1, %65 : vector<16x32xf32>
    %cst_21 = arith.constant dense<0.000000e+00> : vector<16xf32>
    %67 = vector.multi_reduction <add>, %66, %cst_21 [1] : vector<16x32xf32> to vector<16xf32>
    %68 = vector.shape_cast %67 : vector<16xf32> to vector<16x1xf32>
    %cst_22 = arith.constant 3.200000e+01 : f32
    %69 = vector.broadcast %cst_22 : f32 to vector<16x1xf32>
    %70 = arith.divf %68, %69 : vector<16x1xf32>
    %71 = vector.broadcast %70 : vector<16x1xf32> to vector<16x32xf32>
    %72 = arith.subf %66, %71 : vector<16x32xf32>
    %73 = arith.mulf %72, %72 : vector<16x32xf32>
    %cst_23 = arith.constant dense<0.000000e+00> : vector<16xf32>
    %74 = vector.multi_reduction <add>, %73, %cst_23 [1] : vector<16x32xf32> to vector<16xf32>
    %75 = vector.shape_cast %74 : vector<16xf32> to vector<16x1xf32>
    %cst_24 = arith.constant 3.200000e+01 : f32
    %76 = vector.broadcast %cst_24 : f32 to vector<16x1xf32>
    %77 = arith.divf %75, %76 : vector<16x1xf32>
    %78 = vector.broadcast %70 : vector<16x1xf32> to vector<16x32xf32>
    %79 = arith.subf %66, %78 : vector<16x32xf32>
    %cst_25 = arith.constant 9.99999974E-6 : f32
    %80 = vector.broadcast %cst_25 : f32 to vector<16x1xf32>
    %81 = arith.addf %77, %80 : vector<16x1xf32>
    %82 = math.rsqrt %81 : vector<16x1xf32>
    %83 = vector.broadcast %82 : vector<16x1xf32> to vector<16x32xf32>
    %84 = arith.mulf %79, %83 : vector<16x32xf32>
    %c0_26 = arith.constant 0 : index
    %c0_27 = arith.constant 0 : index
    %85 = vector.load %arg2[%c0_26, %c0_27] : memref<32x64xf32, #tpu.memory_space<vmem>>, vector<32x64xf32>
    %cst_28 = arith.constant dense<0.000000e+00> : vector<16x64xf32>
    %86 = tpu.matmul %84, %85, %cst_28 {dimension_numbers = #tpu.dot_dimension_numbers<[1], [0], [0], [1], [0, 0, 1, 1], [], []>} : vector<16x32xf32>, vector<32x64xf32>, vector<16x64xf32> -> vector<16x64xf32>
    %87 = vector.shape_cast %7 : vector<64xf32> to vector<1x64xf32>
    %88 = vector.broadcast %87 : vector<1x64xf32> to vector<16x64xf32>
    %89 = arith.addf %86, %88 : vector<16x64xf32>
    %cst_29 = arith.constant 5.000000e-01 : f32
    %90 = vector.broadcast %cst_29 : f32 to vector<16x64xf32>
    %91 = arith.mulf %90, %89 : vector<16x64xf32>
    %cst_30 = arith.constant 0.707106769 : f32
    %92 = vector.broadcast %cst_30 : f32 to vector<16x64xf32>
    %93 = arith.mulf %89, %92 : vector<16x64xf32>
    %94 = math.erf %93 : vector<16x64xf32>
    %cst_31 = arith.constant 1.000000e+00 : f32
    %95 = vector.broadcast %cst_31 : f32 to vector<16x64xf32>
    %96 = arith.addf %95, %94 : vector<16x64xf32>
    %97 = arith.mulf %91, %96 : vector<16x64xf32>
    %c0_32 = arith.constant 0 : index
    %c0_33 = arith.constant 0 : index
    %98 = vector.load %arg3[%c0_32, %c0_33] : memref<64x32xf32, #tpu.memory_space<vmem>>, vector<64x32xf32>
    %cst_34 = arith.constant dense<0.000000e+00> : vector<16x32xf32>
    %99 = tpu.matmul %97, %98, %cst_34 {dimension_numbers = #tpu.dot_dimension_numbers<[1], [0], [0], [1], [0, 0, 1, 1], [], []>} : vector<16x64xf32>, vector<64x32xf32>, vector<16x32xf32> -> vector<16x32xf32>
    %100 = vector.shape_cast %9 : vector<32xf32> to vector<1x32xf32>
    %101 = vector.broadcast %100 : vector<1x32xf32> to vector<16x32xf32>
    %102 = arith.addf %99, %101 : vector<16x32xf32>
    %103 = arith.addf %66, %102 : vector<16x32xf32>
    %104 = vector.shape_cast %103 : vector<16x32xf32> to vector<2x8x32xf32>
    %c0_35 = arith.constant 0 : index
    %c0_36 = arith.constant 0 : index
    %c0_37 = arith.constant 0 : index
    %105 = vector.load %arg5[%c0_35, %c0_36, %c0_37] : memref<2x8x32xf32, #tpu.memory_space<vmem>>, vector<2x8x32xf32>
    tpu.vector_store %arg5[%c0_35, %c0_36, %c0_37], %104 {strides = array<i32>} : memref<2x8x32xf32, #tpu.memory_space<vmem>>, vector<2x8x32xf32>,
    return
  }
}

</mosaic_0001>

<llo_original>
// kernel: transformer_block.1
$region0: #{transformer_block.1}
  #allocation0 [shape = 'u32[]', space=smem, size = 0x4, offset = 0x4, fixed_abs, tag = 'smem constant byte address 0x4 - core index']
  #allocation1 [shape = 'u32[72,128]{1,0:T(1,128)}', space=vmem, size = 0x9000, scoped, tag = 'internal scratch']
  %s0 = inlined_call_operand.vmem [shape: f32[2,8,32], index: 0, kind: input, shape index: {}]
  %s1 = inlined_call_operand.vmem [shape: f32[32,128], index: 1, kind: input, shape index: {}]
  %s2 = inlined_call_operand.vmem [shape: f32[32,64], index: 2, kind: input, shape index: {}]
  %s3 = inlined_call_operand.vmem [shape: f32[64,32], index: 3, kind: input, shape index: {}]
  %s4 = inlined_call_operand.vmem [shape: f32[4,128], index: 4, kind: input, shape index: {}]
  %s5 = inlined_call_operand.hbm [shape: f32[2,8,32], index: 5, kind: output, shape index: {}]
  %s6 = sld [smem:[#allocation0]]
  $region30: #{transformer_block.1} parent=0
    _
  %s8 = ssub.s32 1, %s6
  %s9 = scalar_select 0, %s8, %s6
  $region1: #{transformer_block.1} parent=0
    #allocation2 [shape = 'u8[8192]{0}', space=vmem, size = 0x2000, scoped, tag = 'output window, operand 0, single buffered']
    #allocation3 [shape = 's32[1]{0}', space=sflag, size = 0x4, scoped, tag = 'scoped memory for transformer_block.1']
    %10 = vsyncpa [#allocation3], 0
    // Predicated region
    $region2: #{transformer_block.1} parent=1 // pred_check
      _
    $region3: #{transformer_block.1} parent=1 // pred_check_branch
      %12 = sbr.rel (0) target = $region5
    $region4: #{transformer_block.1} parent=1 // pred_region
      _
    $region5: #{transformer_block.1} parent=1 // pred_fallthru
      _
    // Predicated region
    $region6: #{transformer_block.1} parent=1 // pred_check
      _
    $region7: #{transformer_block.1} parent=1 // pred_check_branch
      %14 = sbr.rel (0) target = $region9
    $region8: #{transformer_block.1} parent=1 // pred_region
      _
    $region9: #{transformer_block.1} parent=1 // pred_fallthru
      _
    // Predicated region
    $region10: #{transformer_block.1} parent=1 // pred_check
      _
    $region11: #{transformer_block.1} parent=1 // pred_check_branch
      %16 = sbr.rel (0) target = $region13
    $region12: #{transformer_block.1} parent=1 // pred_region
      _
    $region13: #{transformer_block.1} parent=1 // pred_fallthru
      _
    // Predicated region
    $region14: #{transformer_block.1} parent=1 // pred_check
      _
    $region15: #{transformer_block.1} parent=1 // pred_check_branch
      %18 = sbr.rel (0) target = $region17
    $region16: #{transformer_block.1} parent=1 // pred_region
      _
    $region17: #{transformer_block.1} parent=1 // pred_fallthru
      _
    // Predicated region
    $region18: #{transformer_block.1} parent=1 // pred_check
      _
    $region19: #{transformer_block.1} parent=1 // pred_check_branch
      %20 = sbr.rel (0) target = $region21
    $region20: #{transformer_block.1} parent=1 // pred_region
      _
    $region21: #{transformer_block.1} parent=1 // pred_fallthru
      _
    %v21 = vld [vmem:[%s0] sm:$0xff]
    %v22 = vld [vmem:[%s0 + $0x8] sm:$0xff]
    %v23 = vld [vmem:[%s4] sm:$0x1]
    %v24 = vld [vmem:[%s4 + $0x1] sm:$0x1]
    %v25 = vld [vmem:[%s4 + $0x2] sm:$0x1]
    %v26 = vld [vmem:[%s4 + $0x3] sm:$0x1]
    %vm27 = vcmask 261120
    %v28 = vsel %vm27, %v21, 0.0
    %29 = vadd.xlane.f32.xlu0 %v28
    %v30 = vpop.xlane.xlu0 %29
    %v31 = vsel %vm27, %v22, 0.0
    %32 = vadd.xlane.f32.xlu0 %v31
    %v33 = vpop.xlane.xlu0 %32
    %v34 = vrcp.pop 32.0
    %v35 = vmul.f32 32.0, %v34
    %v36 = vsub.f32 1.0, %v35
    %v37 = vmul.f32 %v34, %v36
    %v38 = vadd.f32 %v34, %v37
    %vm39 = vweird.f32 %v34
    %v40 = vsel %vm39, %v34, %v38
    %v41 = vmul.f32 %v30, %v40
    %v42 = vmul.f32 %v33, %v40
    %v43 = vsub.f32 %v21, %v41
    %v44 = vsub.f32 %v22, %v42
    %v45 = vmul.f32 %v43, %v43
    %v46 = vmul.f32 %v44, %v44
    %v47 = vsel %vm27, %v45, 0.0
    %48 = vadd.xlane.f32.xlu0 %v47
    %v49 = vpop.xlane.xlu0 %48
    %v50 = vsel %vm27, %v46, 0.0
    %51 = vadd.xlane.f32.xlu0 %v50
    %v52 = vpop.xlane.xlu0 %51
    %v53 = vmul.f32 %v49, %v40
    %v54 = vmul.f32 %v52, %v40
    %v55 = vadd.f32 %v53, 1e-05
    %v56 = vadd.f32 %v54, 1e-05
    %v57 = vrsqrt.pop %v55
    %v58 = vmul.f32 %v57, %v55
    %v59 = vmul.f32 %v58, %v57
    %v60 = vmul.f32 0.5, %v59
    %v61 = vsub.f32 1.5, %v60
    %v62 = vmul.f32 %v57, %v61
    %vm63 = vweird.f32 %v55
    %vm64 = vweird.f32 %v57
    %vm65 = vmor %vm63, %vm64
    %v66 = vsel %vm65, %v57, %v62
    %v67 = vrsqrt.pop %v56
    %v68 = vmul.f32 %v67, %v56
    %v69 = vmul.f32 %v68, %v67
    %v70 = vmul.f32 0.5, %v69
    %v71 = vsub.f32 1.5, %v70
    %v72 = vmul.f32 %v67, %v71
    %vm73 = vweird.f32 %v56
    %vm74 = vweird.f32 %v67
    %vm75 = vmor %vm73, %vm74
    %v76 = vsel %vm75, %v67, %v72
    %v77 = vmul.f32 %v43, %v66
    %v78 = vmul.f32 %v44, %v76
    %v79 = vld [vmem:[%s1] sm:$0xff]
    %v80 = vld [vmem:[%s1 + $0x8] sm:$0xff]
    %v81 = vld [vmem:[%s1 + $0x10] sm:$0xff]
    %v82 = vld [vmem:[%s1 + $0x18] sm:$0xff]
    %v83 = vperm.slane %v23, 0
    %v85 = vsel %vm27, %v77, 0
    %v88 = vsel %vm27, %v78, 0
    %90 = vmatpush.msra.mxu0 0.0
    %91 = vmatpush.msra.mxu0 0.0
    %92 = vmatpush.msra.mxu0 0.0
    %93 = vmatpush.msra.mxu0 0.0
    %94 = vmatpush.msra.mxu0 0.0
    %95 = vmatpush.msra.mxu0 0.0
    %96 = vmatpush.msra.mxu0 0.0
    %97 = vmatpush.msra.mxu0 0.0
    %98 = vmatpush.msra.mxu0 0.0
    %99 = vmatpush.msra.mxu0 0.0
    %100 = vmatpush.msra.mxu0 0.0
    %101 = vmatpush.msra.mxu0 0.0
    %102 = vmatpush.msra.mxu0 %v82
    %103 = vmatpush.msra.mxu0 %v81
    %104 = vmatpush.msra.mxu0 %v80
    %105 = vmatpush.msra.mxu0 %v79
    %106 = vmatmul.f32.gmra.mxu0 %v85
    %v107 = vpop.f32.mrf.mxu0
    %v108 = vadd.f32 %v83, %v107
    %109 = vmatmul.f32.gmra.mxu0 %v88
    %v110 = vpop.f32.mrf.mxu0
    %v111 = vadd.f32 %v83, %v110
    %112 = vdwg.mxu0
    %115 = vrot.lane.b32.xlu0 %v108, 120
    %v116 = vpop.permute.xlu0 %115
    %117 = vrot.lane.b32.xlu0 %v111, 120
    %v118 = vpop.permute.xlu0 %117
    %121 = vrot.lane.b32.xlu0 %v108, 112
    %v122 = vpop.permute.xlu0 %121
    %123 = vrot.lane.b32.xlu0 %v111, 112
    %v124 = vpop.permute.xlu0 %123
    %127 = vrot.lane.b32.xlu0 %v108, 104
    %v128 = vpop.permute.xlu0 %127
    %129 = vrot.lane.b32.xlu0 %v111, 104
    %v130 = vpop.permute.xlu0 %129
    %v133 = vrot.slane %v122, 4
    %vm134 = vcmask 1047556
    %v135 = vsel %vm134, %v133, %v108
    %v136 = vrot.slane %v108, 4
    %v137 = vsel %vm134, %v122, %v136
    %v139 = vunpack.c.l.s4 1983009808
    %v140 = vunpack.c.0.s8 %v139
    %v141 = vperm.slane %v135, %v140
    %v143 = vunpack.c.l.s4 1983009808
    %v144 = vunpack.c.0.s8 %v143
    %v145 = vperm.slane %v137, %v144
    %v146 = vrot.slane %v128, 4
    %v147 = vsel %vm134, %v146, %v116
    %v148 = vrot.slane %v116, 4
    %v149 = vsel %vm134, %v128, %v148
    %v151 = vunpack.c.l.s4 1983009808
    %v152 = vunpack.c.0.s8 %v151
    %v153 = vperm.slane %v147, %v152
    %v155 = vunpack.c.l.s4 1983009808
    %v156 = vunpack.c.0.s8 %v155
    %v157 = vperm.slane %v149, %v156
    %v158 = vrot.slane %v153, 4
    %v159 = vsel %vm134, %v158, %v141
    %v160 = vrot.slane %v141, 4
    %v161 = vsel %vm134, %v153, %v160
    %v163 = vunpack.c.l.s4 1934713408
    %v164 = vunpack.c.0.s8 %v163
    %v165 = vperm.slane %v159, %v164
    %v167 = vunpack.c.l.s4 1934713408
    %v168 = vunpack.c.0.s8 %v167
    %v169 = vperm.slane %v161, %v168
    %v170 = vrot.slane %v157, 4
    %v171 = vsel %vm134, %v170, %v145
    %v172 = vrot.slane %v145, 4
    %v173 = vsel %vm134, %v157, %v172
    %v175 = vunpack.c.l.s4 1934713408
    %v176 = vunpack.c.0.s8 %v175
    %v177 = vperm.slane %v171, %v176
    %v179 = vunpack.c.l.s4 1934713408
    %v180 = vunpack.c.0.s8 %v179
    %v181 = vperm.slane %v173, %v180
    %v182 = vrot.slane %v165, 4
    %v183 = vsel %vm134, 0.0, %v182
    %v184 = vrot.slane %v169, 4
    %v185 = vsel %vm134, 0.0, %v184
    %v186 = vrot.slane %v177, 4
    %v187 = vsel %vm134, 0.0, %v186
    %v188 = vrot.slane %v181, 4
    %v189 = vsel %vm134, 0.0, %v188
    %v190 = vrot.slane %v124, 4
    %v191 = vsel %vm134, %v190, %v111
    %v192 = vrot.slane %v111, 4
    %v193 = vsel %vm134, %v124, %v192
    %v195 = vunpack.c.l.s4 1983009808
    %v196 = vunpack.c.0.s8 %v195
    %v197 = vperm.slane %v191, %v196
    %v199 = vunpack.c.l.s4 1983009808
    %v200 = vunpack.c.0.s8 %v199
    %v201 = vperm.slane %v193, %v200
    %v202 = vrot.slane %v130, 4
    %v203 = vsel %vm134, %v202, %v118
    %v204 = vrot.slane %v118, 4
    %v205 = vsel %vm134, %v130, %v204
    %v207 = vunpack.c.l.s4 1983009808
    %v208 = vunpack.c.0.s8 %v207
    %v209 = vperm.slane %v203, %v208
    %v211 = vunpack.c.l.s4 1983009808
    %v212 = vunpack.c.0.s8 %v211
    %v213 = vperm.slane %v205, %v212
    %v214 = vrot.slane %v209, 4
    %v215 = vsel %vm134, %v214, %v197
    %v216 = vrot.slane %v197, 4
    %v217 = vsel %vm134, %v209, %v216
    %v219 = vunpack.c.l.s4 1934713408
    %v220 = vunpack.c.0.s8 %v219
    %v221 = vperm.slane %v215, %v220
    %v223 = vunpack.c.l.s4 1934713408
    %v224 = vunpack.c.0.s8 %v223
    %v225 = vperm.slane %v217, %v224
    %v226 = vrot.slane %v213, 4
    %v227 = vsel %vm134, %v226, %v201
    %v228 = vrot.slane %v201, 4
    %v229 = vsel %vm134, %v213, %v228
    %v231 = vunpack.c.l.s4 1934713408
    %v232 = vunpack.c.0.s8 %v231
    %v233 = vperm.slane %v227, %v232
    %v235 = vunpack.c.l.s4 1934713408
    %v236 = vunpack.c.0.s8 %v235
    %v237 = vperm.slane %v229, %v236
    %v238 = vrot.slane %v221, 4
    %v239 = vsel %vm134, 0.0, %v238
    %v240 = vrot.slane %v225, 4
    %v241 = vsel %vm134, 0.0, %v240
    %v242 = vrot.slane %v233, 4
    %v243 = vsel %vm134, 0.0, %v242
    %v244 = vrot.slane %v237, 4
    %v245 = vsel %vm134, 0.0, %v244
    %v246 = vsel %vm134, %v184, %v165
    %v248 = vunpack.c.l.s4 1983009808
    %v249 = vunpack.c.0.s8 %v248
    %v250 = vperm.slane %v246, %v249
    %v251 = vrot.slane %v185, 4
    %v252 = vsel %vm134, %v251, %v183
    %v254 = vunpack.c.l.s4 1983009808
    %v255 = vunpack.c.0.s8 %v254
    %v256 = vperm.slane %v252, %v255
    %v257 = vsel %vm134, %v188, %v177
    %v259 = vunpack.c.l.s4 1983009808
    %v260 = vunpack.c.0.s8 %v259
    %v261 = vperm.slane %v257, %v260
    %v262 = vrot.slane %v189, 4
    %v263 = vsel %vm134, %v262, %v187
    %v265 = vunpack.c.l.s4 1983009808
    %v266 = vunpack.c.0.s8 %v265
    %v267 = vperm.slane %v263, %v266
    %v268 = vrot.slane %v256, 4
    %v269 = vsel %vm134, %v268, %v250
    %v270 = vrot.slane %v250, 4
    %v271 = vsel %vm134, %v256, %v270
    %v273 = vunpack.c.l.s4 1934713408
    %v274 = vunpack.c.0.s8 %v273
    %v275 = vperm.slane %v269, %v274
    %v277 = vunpack.c.l.s4 1934713408
    %v278 = vunpack.c.0.s8 %v277
    %v279 = vperm.slane %v271, %v278
    %v280 = vrot.slane %v267, 4
    %v281 = vsel %vm134, %v280, %v261
    %v282 = vrot.slane %v261, 4
    %v283 = vsel %vm134, %v267, %v282
    %v285 = vunpack.c.l.s4 1934713408
    %v286 = vunpack.c.0.s8 %v285
    %v287 = vperm.slane %v281, %v286
    %v289 = vunpack.c.l.s4 1934713408
    %v290 = vunpack.c.0.s8 %v289
    %v291 = vperm.slane %v283, %v290
    %v292 = vrot.slane %v287, 4
    %v293 = vsel %vm134, %v292, %v275
    %v294 = vrot.slane %v275, 4
    %v295 = vsel %vm134, %v287, %v294
    %v296 = vrot.slane %v291, 4
    %v297 = vsel %vm134, %v296, %v279
    %v298 = vrot.slane %v279, 4
    %v299 = vsel %vm134, %v291, %v298
    %v300 = vsel %vm134, %v240, %v221
    %v302 = vunpack.c.l.s4 1983009808
    %v303 = vunpack.c.0.s8 %v302
    %v304 = vperm.slane %v300, %v303
    %v305 = vrot.slane %v241, 4
    %v306 = vsel %vm134, %v305, %v239
    %v308 = vunpack.c.l.s4 1983009808
    %v309 = vunpack.c.0.s8 %v308
    %v310 = vperm.slane %v306, %v309
    %v311 = vsel %vm134, %v244, %v233
    %v313 = vunpack.c.l.s4 1983009808
    %v314 = vunpack.c.0.s8 %v313
    %v315 = vperm.slane %v311, %v314
    %v316 = vrot.slane %v245, 4
    %v317 = vsel %vm134, %v316, %v243
    %v319 = vunpack.c.l.s4 1983009808
    %v320 = vunpack.c.0.s8 %v319
    %v321 = vperm.slane %v317, %v320
    %v322 = vrot.slane %v310, 4
    %v323 = vsel %vm134, %v322, %v304
    %v324 = vrot.slane %v304, 4
    %v325 = vsel %vm134, %v310, %v324
    %v327 = vunpack.c.l.s4 1934713408
    %v328 = vunpack.c.0.s8 %v327
    %v329 = vperm.slane %v323, %v328
    %v331 = vunpack.c.l.s4 1934713408
    %v332 = vunpack.c.0.s8 %v331
    %v333 = vperm.slane %v325, %v332
    %v334 = vrot.slane %v321, 4
    %v335 = vsel %vm134, %v334, %v315
    %v336 = vrot.slane %v315, 4
    %v337 = vsel %vm134, %v321, %v336
    %v339 = vunpack.c.l.s4 1934713408
    %v340 = vunpack.c.0.s8 %v339
    %v341 = vperm.slane %v335, %v340
    %v343 = vunpack.c.l.s4 1934713408
    %v344 = vunpack.c.0.s8 %v343
    %v345 = vperm.slane %v337, %v344
    %v346 = vrot.slane %v341, 4
    %v347 = vsel %vm134, %v346, %v329
    %v348 = vrot.slane %v329, 4
    %v349 = vsel %vm134, %v341, %v348
    %v350 = vrot.slane %v345, 4
    %v351 = vsel %vm134, %v350, %v333
    %v352 = vrot.slane %v333, 4
    %v353 = vsel %vm134, %v345, %v352
    %354 = vrot.lane.b32.xlu0 %v108, 96
    %v355 = vpop.permute.xlu0 %354
    %356 = vrot.lane.b32.xlu0 %v111, 96
    %v357 = vpop.permute.xlu0 %356
    %358 = vrot.lane.b32.xlu0 %v116, 96
    %v359 = vpop.permute.xlu0 %358
    %360 = vrot.lane.b32.xlu0 %v118, 96
    %v361 = vpop.permute.xlu0 %360
    %362 = vrot.lane.b32.xlu0 %v122, 96
    %v363 = vpop.permute.xlu0 %362
    %364 = vrot.lane.b32.xlu0 %v124, 96
    %v365 = vpop.permute.xlu0 %364
    %366 = vrot.lane.b32.xlu0 %v128, 96
    %v367 = vpop.permute.xlu0 %366
    %368 = vrot.lane.b32.xlu0 %v130, 96
    %v369 = vpop.permute.xlu0 %368
    %v378 = vrot.slane %v363, 4
    %v379 = vsel %vm134, %v378, %v355
    %v380 = vrot.slane %v355, 4
    %v381 = vsel %vm134, %v363, %v380
    %v383 = vunpack.c.l.s4 1983009808
    %v384 = vunpack.c.0.s8 %v383
    %v385 = vperm.slane %v379, %v384
    %v387 = vunpack.c.l.s4 1983009808
    %v388 = vunpack.c.0.s8 %v387
    %v389 = vperm.slane %v381, %v388
    %v390 = vrot.slane %v367, 4
    %v391 = vsel %vm134, %v390, %v359
    %v392 = vrot.slane %v359, 4
    %v393 = vsel %vm134, %v367, %v392
    %v395 = vunpack.c.l.s4 1983009808
    %v396 = vunpack.c.0.s8 %v395
    %v397 = vperm.slane %v391, %v396
    %v399 = vunpack.c.l.s4 1983009808
    %v400 = vunpack.c.0.s8 %v399
    %v401 = vperm.slane %v393, %v400
    %v402 = vrot.slane %v397, 4
    %v403 = vsel %vm134, %v402, %v385
    %v404 = vrot.slane %v385, 4
    %v405 = vsel %vm134, %v397, %v404
    %v407 = vunpack.c.l.s4 1934713408
    %v408 = vunpack.c.0.s8 %v407
    %v409 = vperm.slane %v403, %v408
    %v411 = vunpack.c.l.s4 1934713408
    %v412 = vunpack.c.0.s8 %v411
    %v413 = vperm.slane %v405, %v412
    %v414 = vrot.slane %v401, 4
    %v415 = vsel %vm134, %v414, %v389
    %v416 = vrot.slane %v389, 4
    %v417 = vsel %vm134, %v401, %v416
    %v419 = vunpack.c.l.s4 1934713408
    %v420 = vunpack.c.0.s8 %v419
    %v421 = vperm.slane %v415, %v420
    %v423 = vunpack.c.l.s4 1934713408
    %v424 = vunpack.c.0.s8 %v423
    %v425 = vperm.slane %v417, %v424
    %v426 = vrot.slane %v409, 4
    %v427 = vsel %vm134, 0.0, %v426
    %v428 = vrot.slane %v413, 4
    %v429 = vsel %vm134, 0.0, %v428
    %v430 = vrot.slane %v421, 4
    %v431 = vsel %vm134, 0.0, %v430
    %v432 = vrot.slane %v425, 4
    %v433 = vsel %vm134, 0.0, %v432
    %v434 = vrot.slane %v365, 4
    %v435 = vsel %vm134, %v434, %v357
    %v436 = vrot.slane %v357, 4
    %v437 = vsel %vm134, %v365, %v436
    %v439 = vunpack.c.l.s4 1983009808
    %v440 = vunpack.c.0.s8 %v439
    %v441 = vperm.slane %v435, %v440
    %v443 = vunpack.c.l.s4 1983009808
    %v444 = vunpack.c.0.s8 %v443
    %v445 = vperm.slane %v437, %v444
    %v446 = vrot.slane %v369, 4
    %v447 = vsel %vm134, %v446, %v361
    %v448 = vrot.slane %v361, 4
    %v449 = vsel %vm134, %v369, %v448
    %v451 = vunpack.c.l.s4 1983009808
    %v452 = vunpack.c.0.s8 %v451
    %v453 = vperm.slane %v447, %v452
    %v455 = vunpack.c.l.s4 1983009808
    %v456 = vunpack.c.0.s8 %v455
    %v457 = vperm.slane %v449, %v456
    %v458 = vrot.slane %v453, 4
    %v459 = vsel %vm134, %v458, %v441
    %v460 = vrot.slane %v441, 4
    %v461 = vsel %vm134, %v453, %v460
    %v463 = vunpack.c.l.s4 1934713408
    %v464 = vunpack.c.0.s8 %v463
    %v465 = vperm.slane %v459, %v464
    %v467 = vunpack.c.l.s4 1934713408
    %v468 = vunpack.c.0.s8 %v467
    %v469 = vperm.slane %v461, %v468
    %v470 = vrot.slane %v457, 4
    %v471 = vsel %vm134, %v470, %v445
    %v472 = vrot.slane %v445, 4
    %v473 = vsel %vm134, %v457, %v472
    %v475 = vunpack.c.l.s4 1934713408
    %v476 = vunpack.c.0.s8 %v475
    %v477 = vperm.slane %v471, %v476
    %v479 = vunpack.c.l.s4 1934713408
    %v480 = vunpack.c.0.s8 %v479
    %v481 = vperm.slane %v473, %v480
    %v482 = vrot.slane %v465, 4
    %v483 = vsel %vm134, 0.0, %v482
    %v484 = vrot.slane %v469, 4
    %v485 = vsel %vm134, 0.0, %v484
    %v486 = vrot.slane %v477, 4
    %v487 = vsel %vm134, 0.0, %v486
    %v488 = vrot.slane %v481, 4
    %v489 = vsel %vm134, 0.0, %v488
    %v490 = vsel %vm134, %v428, %v409
    %v492 = vunpack.c.l.s4 1983009808
    %v493 = vunpack.c.0.s8 %v492
    %v494 = vperm.slane %v490, %v493
    %v495 = vrot.slane %v429, 4
    %v496 = vsel %vm134, %v495, %v427
    %v498 = vunpack.c.l.s4 1983009808
    %v499 = vunpack.c.0.s8 %v498
    %v500 = vperm.slane %v496, %v499
    %v501 = vsel %vm134, %v432, %v421
    %v503 = vunpack.c.l.s4 1983009808
    %v504 = vunpack.c.0.s8 %v503
    %v505 = vperm.slane %v501, %v504
    %v506 = vrot.slane %v433, 4
    %v507 = vsel %vm134, %v506, %v431
    %v509 = vunpack.c.l.s4 1983009808
    %v510 = vunpack.c.0.s8 %v509
    %v511 = vperm.slane %v507, %v510
    %v512 = vrot.slane %v500, 4
    %v513 = vsel %vm134, %v512, %v494
    %v514 = vrot.slane %v494, 4
    %v515 = vsel %vm134, %v500, %v514
    %v517 = vunpack.c.l.s4 1934713408
    %v518 = vunpack.c.0.s8 %v517
    %v519 = vperm.slane %v513, %v518
    %v521 = vunpack.c.l.s4 1934713408
    %v522 = vunpack.c.0.s8 %v521
    %v523 = vperm.slane %v515, %v522
    %v524 = vrot.slane %v511, 4
    %v525 = vsel %vm134, %v524, %v505
    %v526 = vrot.slane %v505, 4
    %v527 = vsel %vm134, %v511, %v526
    %v529 = vunpack.c.l.s4 1934713408
    %v530 = vunpack.c.0.s8 %v529
    %v531 = vperm.slane %v525, %v530
    %v533 = vunpack.c.l.s4 1934713408
    %v534 = vunpack.c.0.s8 %v533
    %v535 = vperm.slane %v527, %v534
    %v536 = vrot.slane %v531, 4
    %v537 = vsel %vm134, %v536, %v519
    %v538 = vrot.slane %v519, 4
    %v539 = vsel %vm134, %v531, %v538
    %v540 = vrot.slane %v535, 4
    %v541 = vsel %vm134, %v540, %v523
    %v542 = vrot.slane %v523, 4
    %v543 = vsel %vm134, %v535, %v542
    %v544 = vsel %vm134, %v484, %v465
    %v546 = vunpack.c.l.s4 1983009808
    %v547 = vunpack.c.0.s8 %v546
    %v548 = vperm.slane %v544, %v547
    %v549 = vrot.slane %v485, 4
    %v550 = vsel %vm134, %v549, %v483
    %v552 = vunpack.c.l.s4 1983009808
    %v553 = vunpack.c.0.s8 %v552
    %v554 = vperm.slane %v550, %v553
    %v555 = vsel %vm134, %v488, %v477
    %v557 = vunpack.c.l.s4 1983009808
    %v558 = vunpack.c.0.s8 %v557
    %v559 = vperm.slane %v555, %v558
    %v560 = vrot.slane %v489, 4
    %v561 = vsel %vm134, %v560, %v487
    %v563 = vunpack.c.l.s4 1983009808
    %v564 = vunpack.c.0.s8 %v563
    %v565 = vperm.slane %v561, %v564
    %v566 = vrot.slane %v554, 4
    %v567 = vsel %vm134, %v566, %v548
    %v568 = vrot.slane %v548, 4
    %v569 = vsel %vm134, %v554, %v568
    %v571 = vunpack.c.l.s4 1934713408
    %v572 = vunpack.c.0.s8 %v571
    %v573 = vperm.slane %v567, %v572
    %v575 = vunpack.c.l.s4 1934713408
    %v576 = vunpack.c.0.s8 %v575
    %v577 = vperm.slane %v569, %v576
    %v578 = vrot.slane %v565, 4
    %v579 = vsel %vm134, %v578, %v559
    %v580 = vrot.slane %v559, 4
    %v581 = vsel %vm134, %v565, %v580
    %v583 = vunpack.c.l.s4 1934713408
    %v584 = vunpack.c.0.s8 %v583
    %v585 = vperm.slane %v579, %v584
    %v587 = vunpack.c.l.s4 1934713408
    %v588 = vunpack.c.0.s8 %v587
    %v589 = vperm.slane %v581, %v588
    %v590 = vrot.slane %v585, 4
    %v591 = vsel %vm134, %v590, %v573
    %v592 = vrot.slane %v573, 4
    %v593 = vsel %vm134, %v585, %v592
    %v594 = vrot.slane %v589, 4
    %v595 = vsel %vm134, %v594, %v577
    %v596 = vrot.slane %v577, 4
    %v597 = vsel %vm134, %v589, %v596
    %598 = vrot.lane.b32.xlu0 %v108, 64
    %v599 = vpop.permute.xlu0 %598
    %600 = vrot.lane.b32.xlu0 %v111, 64
    %v601 = vpop.permute.xlu0 %600
    %602 = vrot.lane.b32.xlu0 %v116, 64
    %v603 = vpop.permute.xlu0 %602
    %604 = vrot.lane.b32.xlu0 %v118, 64
    %v605 = vpop.permute.xlu0 %604
    %606 = vrot.lane.b32.xlu0 %v122, 64
    %v607 = vpop.permute.xlu0 %606
    %608 = vrot.lane.b32.xlu0 %v124, 64
    %v609 = vpop.permute.xlu0 %608
    %610 = vrot.lane.b32.xlu0 %v128, 64
    %v611 = vpop.permute.xlu0 %610
    %612 = vrot.lane.b32.xlu0 %v130, 64
    %v613 = vpop.permute.xlu0 %612
    %v622 = vrot.slane %v607, 4
    %v623 = vsel %vm134, %v622, %v599
    %v624 = vrot.slane %v599, 4
    %v625 = vsel %vm134, %v607, %v624
    %v627 = vunpack.c.l.s4 1983009808
    %v628 = vunpack.c.0.s8 %v627
    %v629 = vperm.slane %v623, %v628
    %v631 = vunpack.c.l.s4 1983009808
    %v632 = vunpack.c.0.s8 %v631
    %v633 = vperm.slane %v625, %v632
    %v634 = vrot.slane %v611, 4
    %v635 = vsel %vm134, %v634, %v603
    %v636 = vrot.slane %v603, 4
    %v637 = vsel %vm134, %v611, %v636
    %v639 = vunpack.c.l.s4 1983009808
    %v640 = vunpack.c.0.s8 %v639
    %v641 = vperm.slane %v635, %v640
    %v643 = vunpack.c.l.s4 1983009808
    %v644 = vunpack.c.0.s8 %v643
    %v645 = vperm.slane %v637, %v644
    %v646 = vrot.slane %v641, 4
    %v647 = vsel %vm134, %v646, %v629
    %v648 = vrot.slane %v629, 4
    %v649 = vsel %vm134, %v641, %v648
    %v651 = vunpack.c.l.s4 1934713408
    %v652 = vunpack.c.0.s8 %v651
    %v653 = vperm.slane %v647, %v652
    %v655 = vunpack.c.l.s4 1934713408
    %v656 = vunpack.c.0.s8 %v655
    %v657 = vperm.slane %v649, %v656
    %v658 = vrot.slane %v645, 4
    %v659 = vsel %vm134, %v658, %v633
    %v660 = vrot.slane %v633, 4
    %v661 = vsel %vm134, %v645, %v660
    %v663 = vunpack.c.l.s4 1934713408
    %v664 = vunpack.c.0.s8 %v663
    %v665 = vperm.slane %v659, %v664
    %v667 = vunpack.c.l.s4 1934713408
    %v668 = vunpack.c.0.s8 %v667
    %v669 = vperm.slane %v661, %v668
    %v670 = vrot.slane %v653, 4
    %v671 = vsel %vm134, 0.0, %v670
    %v672 = vrot.slane %v657, 4
    %v673 = vsel %vm134, 0.0, %v672
    %v674 = vrot.slane %v665, 4
    %v675 = vsel %vm134, 0.0, %v674
    %v676 = vrot.slane %v669, 4
    %v677 = vsel %vm134, 0.0, %v676
    %v678 = vrot.slane %v609, 4
    %v679 = vsel %vm134, %v678, %v601
    %v680 = vrot.slane %v601, 4
    %v681 = vsel %vm134, %v609, %v680
    %v683 = vunpack.c.l.s4 1983009808
    %v684 = vunpack.c.0.s8 %v683
    %v685 = vperm.slane %v679, %v684
    %v687 = vunpack.c.l.s4 1983009808
    %v688 = vunpack.c.0.s8 %v687
    %v689 = vperm.slane %v681, %v688
    %v690 = vrot.slane %v613, 4
    %v691 = vsel %vm134, %v690, %v605
    %v692 = vrot.slane %v605, 4
    %v693 = vsel %vm134, %v613, %v692
    %v695 = vunpack.c.l.s4 1983009808
    %v696 = vunpack.c.0.s8 %v695
    %v697 = vperm.slane %v691, %v696
    %v699 = vunpack.c.l.s4 1983009808
    %v700 = vunpack.c.0.s8 %v699
    %v701 = vperm.slane %v693, %v700
    %v702 = vrot.slane %v697, 4
    %v703 = vsel %vm134, %v702, %v685
    %v704 = vrot.slane %v685, 4
    %v705 = vsel %vm134, %v697, %v704
    %v707 = vunpack.c.l.s4 1934713408
    %v708 = vunpack.c.0.s8 %v707
    %v709 = vperm.slane %v703, %v708
    %v711 = vunpack.c.l.s4 1934713408
    %v712 = vunpack.c.0.s8 %v711
    %v713 = vperm.slane %v705, %v712
    %v714 = vrot.slane %v701, 4
    %v715 = vsel %vm134, %v714, %v689
    %v716 = vrot.slane %v689, 4
    %v717 = vsel %vm134, %v701, %v716
    %v719 = vunpack.c.l.s4 1934713408
    %v720 = vunpack.c.0.s8 %v719
    %v721 = vperm.slane %v715, %v720
    %v723 = vunpack.c.l.s4 1934713408
    %v724 = vunpack.c.0.s8 %v723
    %v725 = vperm.slane %v717, %v724
    %v726 = vrot.slane %v709, 4
    %v727 = vsel %vm134, 0.0, %v726
    %v728 = vrot.slane %v713, 4
    %v729 = vsel %vm134, 0.0, %v728
    %v730 = vrot.slane %v721, 4
    %v731 = vsel %vm134, 0.0, %v730
    %v732 = vrot.slane %v725, 4
    %v733 = vsel %vm134, 0.0, %v732
    %v734 = vsel %vm134, %v672, %v653
    %v736 = vunpack.c.l.s4 1983009808
    %v737 = vunpack.c.0.s8 %v736
    %v738 = vperm.slane %v734, %v737
    %v739 = vrot.slane %v673, 4
    %v740 = vsel %vm134, %v739, %v671
    %v742 = vunpack.c.l.s4 1983009808
    %v743 = vunpack.c.0.s8 %v742
    %v744 = vperm.slane %v740, %v743
    %v745 = vsel %vm134, %v676, %v665
    %v747 = vunpack.c.l.s4 1983009808
    %v748 = vunpack.c.0.s8 %v747
    %v749 = vperm.slane %v745, %v748
    %v750 = vrot.slane %v677, 4
    %v751 = vsel %vm134, %v750, %v675
    %v753 = vunpack.c.l.s4 1983009808
    %v754 = vunpack.c.0.s8 %v753
    %v755 = vperm.slane %v751, %v754
    %v756 = vrot.slane %v744, 4
    %v757 = vsel %vm134, %v756, %v738
    %v758 = vrot.slane %v738, 4
    %v759 = vsel %vm134, %v744, %v758
    %v761 = vunpack.c.l.s4 1934713408
    %v762 = vunpack.c.0.s8 %v761
    %v763 = vperm.slane %v757, %v762
    %v765 = vunpack.c.l.s4 1934713408
    %v766 = vunpack.c.0.s8 %v765
    %v767 = vperm.slane %v759, %v766
    %v768 = vrot.slane %v755, 4
    %v769 = vsel %vm134, %v768, %v749
    %v770 = vrot.slane %v749, 4
    %v771 = vsel %vm134, %v755, %v770
    %v773 = vunpack.c.l.s4 1934713408
    %v774 = vunpack.c.0.s8 %v773
    %v775 = vperm.slane %v769, %v774
    %v777 = vunpack.c.l.s4 1934713408
    %v778 = vunpack.c.0.s8 %v777
    %v779 = vperm.slane %v771, %v778
    %v780 = vrot.slane %v775, 4
    %v781 = vsel %vm134, %v780, %v763
    %v782 = vrot.slane %v763, 4
    %v783 = vsel %vm134, %v775, %v782
    %v784 = vrot.slane %v779, 4
    %v785 = vsel %vm134, %v784, %v767
    %v786 = vrot.slane %v767, 4
    %v787 = vsel %vm134, %v779, %v786
    %v788 = vsel %vm134, %v728, %v709
    %v790 = vunpack.c.l.s4 1983009808
    %v791 = vunpack.c.0.s8 %v790
    %v792 = vperm.slane %v788, %v791
    %v793 = vrot.slane %v729, 4
    %v794 = vsel %vm134, %v793, %v727
    %v796 = vunpack.c.l.s4 1983009808
    %v797 = vunpack.c.0.s8 %v796
    %v798 = vperm.slane %v794, %v797
    %v799 = vsel %vm134, %v732, %v721
    %v801 = vunpack.c.l.s4 1983009808
    %v802 = vunpack.c.0.s8 %v801
    %v803 = vperm.slane %v799, %v802
    %v804 = vrot.slane %v733, 4
    %v805 = vsel %vm134, %v804, %v731
    %v807 = vunpack.c.l.s4 1983009808
    %v808 = vunpack.c.0.s8 %v807
    %v809 = vperm.slane %v805, %v808
    %v810 = vrot.slane %v798, 4
    %v811 = vsel %vm134, %v810, %v792
    %v812 = vrot.slane %v792, 4
    %v813 = vsel %vm134, %v798, %v812
    %v815 = vunpack.c.l.s4 1934713408
    %v816 = vunpack.c.0.s8 %v815
    %v817 = vperm.slane %v811, %v816
    %v819 = vunpack.c.l.s4 1934713408
    %v820 = vunpack.c.0.s8 %v819
    %v821 = vperm.slane %v813, %v820
    %v822 = vrot.slane %v809, 4
    %v823 = vsel %vm134, %v822, %v803
    %v824 = vrot.slane %v803, 4
    %v825 = vsel %vm134, %v809, %v824
    %v827 = vunpack.c.l.s4 1934713408
    %v828 = vunpack.c.0.s8 %v827
    %v829 = vperm.slane %v823, %v828
    %v831 = vunpack.c.l.s4 1934713408
    %v832 = vunpack.c.0.s8 %v831
    %v833 = vperm.slane %v825, %v832
    %v834 = vrot.slane %v829, 4
    %v835 = vsel %vm134, %v834, %v817
    %v836 = vrot.slane %v817, 4
    %v837 = vsel %vm134, %v829, %v836
    %v838 = vrot.slane %v833, 4
    %v839 = vsel %vm134, %v838, %v821
    %v840 = vrot.slane %v821, 4
    %v841 = vsel %vm134, %v833, %v840
    %vm842 = vcmask 64512
    %v844 = vsel %vm842, %v293, 0
    %v847 = vsel %vm842, %v537, 0
    %849 = vmatpush.xpose.msra.mxu0 0.0
    %850 = vmatpush.xpose.msra.mxu0 0.0
    %851 = vmatpush.xpose.msra.mxu0 0.0
    %852 = vmatpush.xpose.msra.mxu0 0.0
    %853 = vmatpush.xpose.msra.mxu0 0.0
    %854 = vmatpush.xpose.msra.mxu0 0.0
    %855 = vmatpush.xpose.msra.mxu0 0.0
    %856 = vmatpush.xpose.msra.mxu0 0.0
    %857 = vmatpush.xpose.msra.mxu0 0.0
    %858 = vmatpush.xpose.msra.mxu0 0.0
    %859 = vmatpush.xpose.msra.mxu0 0.0
    %860 = vmatpush.xpose.msra.mxu0 0.0
    %861 = vmatpush.xpose.msra.mxu0 0.0
    %862 = vmatpush.xpose.msra.mxu0 0.0
    %863 = vmatpush.xpose.msra.mxu0 0.0
    %864 = vmatpush.xpose.msra.mxu0 %v847
    %865 = vmatmul.f32.gmra.mxu0 %v844
    %v866 = vpop.f32.mrf.mxu0
    %v867 = vadd.f32 0.0, %v866
    %868 = vdwg.mxu0
    %v870 = vsel %vm842, %v295, 0
    %v873 = vsel %vm842, %v539, 0
    %875 = vmatpush.xpose.msra.mxu0 0.0
    %876 = vmatpush.xpose.msra.mxu0 0.0
    %877 = vmatpush.xpose.msra.mxu0 0.0
    %878 = vmatpush.xpose.msra.mxu0 0.0
    %879 = vmatpush.xpose.msra.mxu0 0.0
    %880 = vmatpush.xpose.msra.mxu0 0.0
    %881 = vmatpush.xpose.msra.mxu0 0.0
    %882 = vmatpush.xpose.msra.mxu0 0.0
    %883 = vmatpush.xpose.msra.mxu0 0.0
    %884 = vmatpush.xpose.msra.mxu0 0.0
    %885 = vmatpush.xpose.msra.mxu0 0.0
    %886 = vmatpush.xpose.msra.mxu0 0.0
    %887 = vmatpush.xpose.msra.mxu0 0.0
    %888 = vmatpush.xpose.msra.mxu0 0.0
    %889 = vmatpush.xpose.msra.mxu0 0.0
    %890 = vmatpush.xpose.msra.mxu0 %v873
    %891 = vmatmul.f32.gmra.mxu0 %v870
    %v892 = vpop.f32.mrf.mxu0
    %v893 = vadd.f32 0.0, %v892
    %894 = vdwg.mxu0
    %v896 = vsel %vm842, %v297, 0
    %v899 = vsel %vm842, %v541, 0
    %901 = vmatpush.xpose.msra.mxu0 0.0
    %902 = vmatpush.xpose.msra.mxu0 0.0
    %903 = vmatpush.xpose.msra.mxu0 0.0
    %904 = vmatpush.xpose.msra.mxu0 0.0
    %905 = vmatpush.xpose.msra.mxu0 0.0
    %906 = vmatpush.xpose.msra.mxu0 0.0
    %907 = vmatpush.xpose.msra.mxu0 0.0
    %908 = vmatpush.xpose.msra.mxu0 0.0
    %909 = vmatpush.xpose.msra.mxu0 0.0
    %910 = vmatpush.xpose.msra.mxu0 0.0
    %911 = vmatpush.xpose.msra.mxu0 0.0
    %912 = vmatpush.xpose.msra.mxu0 0.0
    %913 = vmatpush.xpose.msra.mxu0 0.0
    %914 = vmatpush.xpose.msra.mxu0 0.0
    %915 = vmatpush.xpose.msra.mxu0 0.0
    %916 = vmatpush.xpose.msra.mxu0 %v899
    %917 = vmatmul.f32.gmra.mxu0 %v896
    %v918 = vpop.f32.mrf.mxu0
    %v919 = vadd.f32 0.0, %v918
    %920 = vdwg.mxu0
    %v922 = vsel %vm842, %v299, 0
    %v925 = vsel %vm842, %v543, 0
    %927 = vmatpush.xpose.msra.mxu0 0.0
    %928 = vmatpush.xpose.msra.mxu0 0.0
    %929 = vmatpush.xpose.msra.mxu0 0.0
    %930 = vmatpush.xpose.msra.mxu0 0.0
    %931 = vmatpush.xpose.msra.mxu0 0.0
    %932 = vmatpush.xpose.msra.mxu0 0.0
    %933 = vmatpush.xpose.msra.mxu0 0.0
    %934 = vmatpush.xpose.msra.mxu0 0.0
    %935 = vmatpush.xpose.msra.mxu0 0.0
    %936 = vmatpush.xpose.msra.mxu0 0.0
    %937 = vmatpush.xpose.msra.mxu0 0.0
    %938 = vmatpush.xpose.msra.mxu0 0.0
    %939 = vmatpush.xpose.msra.mxu0 0.0
    %940 = vmatpush.xpose.msra.mxu0 0.0
    %941 = vmatpush.xpose.msra.mxu0 0.0
    %942 = vmatpush.xpose.msra.mxu0 %v925
    %943 = vmatmul.f32.gmra.mxu0 %v922
    %v944 = vpop.f32.mrf.mxu0
    %v945 = vadd.f32 0.0, %v944
    %946 = vdwg.mxu0
    %v948 = vsel %vm842, %v347, 0
    %v951 = vsel %vm842, %v591, 0
    %953 = vmatpush.xpose.msra.mxu0 0.0
    %954 = vmatpush.xpose.msra.mxu0 0.0
    %955 = vmatpush.xpose.msra.mxu0 0.0
    %956 = vmatpush.xpose.msra.mxu0 0.0
    %957 = vmatpush.xpose.msra.mxu0 0.0
    %958 = vmatpush.xpose.msra.mxu0 0.0
    %959 = vmatpush.xpose.msra.mxu0 0.0
    %960 = vmatpush.xpose.msra.mxu0 0.0
    %961 = vmatpush.xpose.msra.mxu0 0.0
    %962 = vmatpush.xpose.msra.mxu0 0.0
    %963 = vmatpush.xpose.msra.mxu0 0.0
    %964 = vmatpush.xpose.msra.mxu0 0.0
    %965 = vmatpush.xpose.msra.mxu0 0.0
    %966 = vmatpush.xpose.msra.mxu0 0.0
    %967 = vmatpush.xpose.msra.mxu0 0.0
    %968 = vmatpush.xpose.msra.mxu0 %v951
    %969 = vmatmul.f32.gmra.mxu0 %v948
    %v970 = vpop.f32.mrf.mxu0
    %v971 = vadd.f32 0.0, %v970
    %972 = vdwg.mxu0
    %v974 = vsel %vm842, %v349, 0
    %v977 = vsel %vm842, %v593, 0
    %979 = vmatpush.xpose.msra.mxu0 0.0
    %980 = vmatpush.xpose.msra.mxu0 0.0
    %981 = vmatpush.xpose.msra.mxu0 0.0
    %982 = vmatpush.xpose.msra.mxu0 0.0
    %983 = vmatpush.xpose.msra.mxu0 0.0
    %984 = vmatpush.xpose.msra.mxu0 0.0
    %985 = vmatpush.xpose.msra.mxu0 0.0
    %986 = vmatpush.xpose.msra.mxu0 0.0
    %987 = vmatpush.xpose.msra.mxu0 0.0
    %988 = vmatpush.xpose.msra.mxu0 0.0
    %989 = vmatpush.xpose.msra.mxu0 0.0
    %990 = vmatpush.xpose.msra.mxu0 0.0
    %991 = vmatpush.xpose.msra.mxu0 0.0
    %992 = vmatpush.xpose.msra.mxu0 0.0
    %993 = vmatpush.xpose.msra.mxu0 0.0
    %994 = vmatpush.xpose.msra.mxu0 %v977
    %995 = vmatmul.f32.gmra.mxu0 %v974
    %v996 = vpop.f32.mrf.mxu0
    %v997 = vadd.f32 0.0, %v996
    %998 = vdwg.mxu0
    %v1000 = vsel %vm842, %v351, 0
    %v1003 = vsel %vm842, %v595, 0
    %1005 = vmatpush.xpose.msra.mxu0 0.0
    %1006 = vmatpush.xpose.msra.mxu0 0.0
    %1007 = vmatpush.xpose.msra.mxu0 0.0
    %1008 = vmatpush.xpose.msra.mxu0 0.0
    %1009 = vmatpush.xpose.msra.mxu0 0.0
    %1010 = vmatpush.xpose.msra.mxu0 0.0
    %1011 = vmatpush.xpose.msra.mxu0 0.0
    %1012 = vmatpush.xpose.msra.mxu0 0.0
    %1013 = vmatpush.xpose.msra.mxu0 0.0
    %1014 = vmatpush.xpose.msra.mxu0 0.0
    %1015 = vmatpush.xpose.msra.mxu0 0.0
    %1016 = vmatpush.xpose.msra.mxu0 0.0
    %1017 = vmatpush.xpose.msra.mxu0 0.0
    %1018 = vmatpush.xpose.msra.mxu0 0.0
    %1019 = vmatpush.xpose.msra.mxu0 0.0
    %1020 = vmatpush.xpose.msra.mxu0 %v1003
    %1021 = vmatmul.f32.gmra.mxu0 %v1000
    %v1022 = vpop.f32.mrf.mxu0
    %v1023 = vadd.f32 0.0, %v1022
    %1024 = vdwg.mxu0
    %v1026 = vsel %vm842, %v353, 0
    %v1029 = vsel %vm842, %v597, 0
    %1031 = vmatpush.xpose.msra.mxu0 0.0
    %1032 = vmatpush.xpose.msra.mxu0 0.0
    %1033 = vmatpush.xpose.msra.mxu0 0.0
    %1034 = vmatpush.xpose.msra.mxu0 0.0
    %1035 = vmatpush.xpose.msra.mxu0 0.0
    %1036 = vmatpush.xpose.msra.mxu0 0.0
    %1037 = vmatpush.xpose.msra.mxu0 0.0
    %1038 = vmatpush.xpose.msra.mxu0 0.0
    %1039 = vmatpush.xpose.msra.mxu0 0.0
    %1040 = vmatpush.xpose.msra.mxu0 0.0
    %1041 = vmatpush.xpose.msra.mxu0 0.0
    %1042 = vmatpush.xpose.msra.mxu0 0.0
    %1043 = vmatpush.xpose.msra.mxu0 0.0
    %1044 = vmatpush.xpose.msra.mxu0 0.0
    %1045 = vmatpush.xpose.msra.mxu0 0.0
    %1046 = vmatpush.xpose.msra.mxu0 %v1029
    %1047 = vmatmul.f32.gmra.mxu0 %v1026
    %v1048 = vpop.f32.mrf.mxu0
    %v1049 = vadd.f32 0.0, %v1048
    %1050 = vdwg.mxu0
    %v1051 = vmul.f32 %v867, 0.35355338
    %v1052 = vmul.f32 %v893, 0.35355338
    %v1053 = vmul.f32 %v919, 0.35355338
    %v1054 = vmul.f32 %v945, 0.35355338
    %v1055 = vmul.f32 %v971, 0.35355338
    %v1056 = vmul.f32 %v997, 0.35355338
    %v1057 = vmul.f32 %v1023, 0.35355338
    %v1058 = vmul.f32 %v1049, 0.35355338
    %v1059 = vsel %vm842, %v1051, -inf
    %1060 = vmax.xlane.f32.xlu0 %v1059
    %v1061 = vpop.xlane.xlu0 %1060
    %v1062 = vsel %vm842, %v1052, -inf
    %1063 = vmax.xlane.f32.xlu0 %v1062
    %v1064 = vpop.xlane.xlu0 %1063
    %v1065 = vsel %vm842, %v1053, -inf
    %1066 = vmax.xlane.f32.xlu0 %v1065
    %v1067 = vpop.xlane.xlu0 %1066
    %v1068 = vsel %vm842, %v1054, -inf
    %1069 = vmax.xlane.f32.xlu0 %v1068
    %v1070 = vpop.xlane.xlu0 %1069
    %v1071 = vsel %vm842, %v1055, -inf
    %1072 = vmax.xlane.f32.xlu0 %v1071
    %v1073 = vpop.xlane.xlu0 %1072
    %v1074 = vsel %vm842, %v1056, -inf
    %1075 = vmax.xlane.f32.xlu0 %v1074
    %v1076 = vpop.xlane.xlu0 %1075
    %v1077 = vsel %vm842, %v1057, -inf
    %1078 = vmax.xlane.f32.xlu0 %v1077
    %v1079 = vpop.xlane.xlu0 %1078
    %v1080 = vsel %vm842, %v1058, -inf
    %1081 = vmax.xlane.f32.xlu0 %v1080
    %v1082 = vpop.xlane.xlu0 %1081
    %v1083 = vsub.f32 %v1051, %v1061
    %v1084 = vsub.f32 %v1052, %v1064
    %v1085 = vsub.f32 %v1053, %v1067
    %v1086 = vsub.f32 %v1054, %v1070
    %v1087 = vsub.f32 %v1055, %v1073
    %v1088 = vsub.f32 %v1056, %v1076
    %v1089 = vsub.f32 %v1057, %v1079
    %v1090 = vsub.f32 %v1058, %v1082
    %v1091 = vmul.f32 %v1083, 1.442695
    %v1092 = vpow.pop %v1091
    %v1093 = vmul.f32 %v1084, 1.442695
    %v1094 = vpow.pop %v1093
    %v1095 = vmul.f32 %v1085, 1.442695
    %v1096 = vpow.pop %v1095
    %v1097 = vmul.f32 %v1086, 1.442695
    %v1098 = vpow.pop %v1097
    %v1099 = vmul.f32 %v1087, 1.442695
    %v1100 = vpow.pop %v1099
    %v1101 = vmul.f32 %v1088, 1.442695
    %v1102 = vpow.pop %v1101
    %v1103 = vmul.f32 %v1089, 1.442695
    %v1104 = vpow.pop %v1103
    %v1105 = vmul.f32 %v1090, 1.442695
    %v1106 = vpow.pop %v1105
    %v1107 = vsel %vm842, %v1092, 0.0
    %1108 = vadd.xlane.f32.xlu0 %v1107
    %v1109 = vpop.xlane.xlu0 %1108
    %v1110 = vsel %vm842, %v1094, 0.0
    %1111 = vadd.xlane.f32.xlu0 %v1110
    %v1112 = vpop.xlane.xlu0 %1111
    %v1113 = vsel %vm842, %v1096, 0.0
    %1114 = vadd.xlane.f32.xlu0 %v1113
    %v1115 = vpop.xlane.xlu0 %1114
    %v1116 = vsel %vm842, %v1098, 0.0
    %1117 = vadd.xlane.f32.xlu0 %v1116
    %v1118 = vpop.xlane.xlu0 %1117
    %v1119 = vsel %vm842, %v1100, 0.0
    %1120 = vadd.xlane.f32.xlu0 %v1119
    %v1121 = vpop.xlane.xlu0 %1120
    %v1122 = vsel %vm842, %v1102, 0.0
    %1123 = vadd.xlane.f32.xlu0 %v1122
    %v1124 = vpop.xlane.xlu0 %1123
    %v1125 = vsel %vm842, %v1104, 0.0
    %1126 = vadd.xlane.f32.xlu0 %v1125
    %v1127 = vpop.xlane.xlu0 %1126
    %v1128 = vsel %vm842, %v1106, 0.0
    %1129 = vadd.xlane.f32.xlu0 %v1128
    %v1130 = vpop.xlane.xlu0 %1129
    %v1131 = vrcp.pop %v1109
    %v1132 = vmul.f32 %v1109, %v1131
    %v1133 = vsub.f32 1.0, %v1132
    %v1134 = vmul.f32 %v1131, %v1133
    %v1135 = vadd.f32 %v1131, %v1134
    %vm1136 = vweird.f32 %v1109
    %vm1137 = vweird.f32 %v1131
    %vm1138 = vmor %vm1136, %vm1137
    %v1139 = vsel %vm1138, %v1131, %v1135
    %v1140 = vand.u32 2147483647, %v1109
    %vm1141 = vcmp.eq.f32.partialorder %v1140, 8.507059e+37
    %v1142 = vand.u32 %v1109, 2147483648
    %v1143 = vor.u32 1.1754944e-38, %v1142
    %v1144 = vsel %vm1141, %v1143, %v1139
    %v1145 = vmul.f32 %v1092, %v1144
    %v1146 = vrcp.pop %v1112
    %v1147 = vmul.f32 %v1112, %v1146
    %v1148 = vsub.f32 1.0, %v1147
    %v1149 = vmul.f32 %v1146, %v1148
    %v1150 = vadd.f32 %v1146, %v1149
    %vm1151 = vweird.f32 %v1112
    %vm1152 = vweird.f32 %v1146
    %vm1153 = vmor %vm1151, %vm1152
    %v1154 = vsel %vm1153, %v1146, %v1150
    %v1155 = vand.u32 2147483647, %v1112
    %vm1156 = vcmp.eq.f32.partialorder %v1155, 8.507059e+37
    %v1157 = vand.u32 %v1112, 2147483648
    %v1158 = vor.u32 1.1754944e-38, %v1157
    %v1159 = vsel %vm1156, %v1158, %v1154
    %v1160 = vmul.f32 %v1094, %v1159
    %v1161 = vrcp.pop %v1115
    %v1162 = vmul.f32 %v1115, %v1161
    %v1163 = vsub.f32 1.0, %v1162
    %v1164 = vmul.f32 %v1161, %v1163
    %v1165 = vadd.f32 %v1161, %v1164
    %vm1166 = vweird.f32 %v1115
    %vm1167 = vweird.f32 %v1161
    %vm1168 = vmor %vm1166, %vm1167
    %v1169 = vsel %vm1168, %v1161, %v1165
    %v1170 = vand.u32 2147483647, %v1115
    %vm1171 = vcmp.eq.f32.partialorder %v1170, 8.507059e+37
    %v1172 = vand.u32 %v1115, 2147483648
    %v1173 = vor.u32 1.1754944e-38, %v1172
    %v1174 = vsel %vm1171, %v1173, %v1169
    %v1175 = vmul.f32 %v1096, %v1174
    %v1176 = vrcp.pop %v1118
    %v1177 = vmul.f32 %v1118, %v1176
    %v1178 = vsub.f32 1.0, %v1177
    %v1179 = vmul.f32 %v1176, %v1178
    %v1180 = vadd.f32 %v1176, %v1179
    %vm1181 = vweird.f32 %v1118
    %vm1182 = vweird.f32 %v1176
    %vm1183 = vmor %vm1181, %vm1182
    %v1184 = vsel %vm1183, %v1176, %v1180
    %v1185 = vand.u32 2147483647, %v1118
    %vm1186 = vcmp.eq.f32.partialorder %v1185, 8.507059e+37
    %v1187 = vand.u32 %v1118, 2147483648
    %v1188 = vor.u32 1.1754944e-38, %v1187
    %v1189 = vsel %vm1186, %v1188, %v1184
    %v1190 = vmul.f32 %v1098, %v1189
    %v1191 = vrcp.pop %v1121
    %v1192 = vmul.f32 %v1121, %v1191
    %v1193 = vsub.f32 1.0, %v1192
    %v1194 = vmul.f32 %v1191, %v1193
    %v1195 = vadd.f32 %v1191, %v1194
    %vm1196 = vweird.f32 %v1121
    %vm1197 = vweird.f32 %v1191
    %vm1198 = vmor %vm1196, %vm1197
    %v1199 = vsel %vm1198, %v1191, %v1195
    %v1200 = vand.u32 2147483647, %v1121
    %vm1201 = vcmp.eq.f32.partialorder %v1200, 8.507059e+37
    %v1202 = vand.u32 %v1121, 2147483648
    %v1203 = vor.u32 1.1754944e-38, %v1202
    %v1204 = vsel %vm1201, %v1203, %v1199
    %v1205 = vmul.f32 %v1100, %v1204
    %v1206 = vrcp.pop %v1124
    %v1207 = vmul.f32 %v1124, %v1206
    %v1208 = vsub.f32 1.0, %v1207
    %v1209 = vmul.f32 %v1206, %v1208
    %v1210 = vadd.f32 %v1206, %v1209
    %vm1211 = vweird.f32 %v1124
    %vm1212 = vweird.f32 %v1206
    %vm1213 = vmor %vm1211, %vm1212
    %v1214 = vsel %vm1213, %v1206, %v1210
    %v1215 = vand.u32 2147483647, %v1124
    %vm1216 = vcmp.eq.f32.partialorder %v1215, 8.507059e+37
    %v1217 = vand.u32 %v1124, 2147483648
    %v1218 = vor.u32 1.1754944e-38, %v1217
    %v1219 = vsel %vm1216, %v1218, %v1214
    %v1220 = vmul.f32 %v1102, %v1219
    %v1221 = vrcp.pop %v1127
    %v1222 = vmul.f32 %v1127, %v1221
    %v1223 = vsub.f32 1.0, %v1222
    %v1224 = vmul.f32 %v1221, %v1223
    %v1225 = vadd.f32 %v1221, %v1224
    %vm1226 = vweird.f32 %v1127
    %vm1227 = vweird.f32 %v1221
    %vm1228 = vmor %vm1226, %vm1227
    %v1229 = vsel %vm1228, %v1221, %v1225
    %v1230 = vand.u32 2147483647, %v1127
    %vm1231 = vcmp.eq.f32.partialorder %v1230, 8.507059e+37
    %v1232 = vand.u32 %v1127, 2147483648
    %v1233 = vor.u32 1.1754944e-38, %v1232
    %v1234 = vsel %vm1231, %v1233, %v1229
    %v1235 = vmul.f32 %v1104, %v1234
    %v1236 = vrcp.pop %v1130
    %v1237 = vmul.f32 %v1130, %v1236
    %v1238 = vsub.f32 1.0, %v1237
    %v1239 = vmul.f32 %v1236, %v1238
    %v1240 = vadd.f32 %v1236, %v1239
    %vm1241 = vweird.f32 %v1130
    %vm1242 = vweird.f32 %v1236
    %vm1243 = vmor %vm1241, %vm1242
    %v1244 = vsel %vm1243, %v1236, %v1240
    %v1245 = vand.u32 2147483647, %v1130
    %vm1246 = vcmp.eq.f32.partialorder %v1245, 8.507059e+37
    %v1247 = vand.u32 %v1130, 2147483648
    %v1248 = vor.u32 1.1754944e-38, %v1247
    %v1249 = vsel %vm1246, %v1248, %v1244
    %v1250 = vmul.f32 %v1106, %v1249
    %v1252 = vsel %vm842, %v1145, 0
    %1254 = vmatpush.msra.mxu0 0.0
    %1255 = vmatpush.msra.mxu0 0.0
    %1256 = vmatpush.msra.mxu0 0.0
    %1257 = vmatpush.msra.mxu0 0.0
    %1258 = vmatpush.msra.mxu0 0.0
    %1259 = vmatpush.msra.mxu0 0.0
    %1260 = vmatpush.msra.mxu0 0.0
    %1261 = vmatpush.msra.mxu0 0.0
    %1262 = vmatpush.msra.mxu0 0.0
    %1263 = vmatpush.msra.mxu0 0.0
    %1264 = vmatpush.msra.mxu0 0.0
    %1265 = vmatpush.msra.mxu0 0.0
    %1266 = vmatpush.msra.mxu0 0.0
    %1267 = vmatpush.msra.mxu0 0.0
    %1268 = vmatpush.msra.mxu0 0.0
    %1269 = vmatpush.msra.mxu0 %v781
    %1270 = vmatmul.f32.gmra.mxu0 %v1252
    %v1271 = vpop.f32.mrf.mxu0
    %v1272 = vadd.f32 0.0, %v1271
    %1273 = vdwg.mxu0
    %v1275 = vsel %vm842, %v1160, 0
    %1277 = vmatpush.msra.mxu0 0.0
    %1278 = vmatpush.msra.mxu0 0.0
    %1279 = vmatpush.msra.mxu0 0.0
    %1280 = vmatpush.msra.mxu0 0.0
    %1281 = vmatpush.msra.mxu0 0.0
    %1282 = vmatpush.msra.mxu0 0.0
    %1283 = vmatpush.msra.mxu0 0.0
    %1284 = vmatpush.msra.mxu0 0.0
    %1285 = vmatpush.msra.mxu0 0.0
    %1286 = vmatpush.msra.mxu0 0.0
    %1287 = vmatpush.msra.mxu0 0.0
    %1288 = vmatpush.msra.mxu0 0.0
    %1289 = vmatpush.msra.mxu0 0.0
    %1290 = vmatpush.msra.mxu0 0.0
    %1291 = vmatpush.msra.mxu0 0.0
    %1292 = vmatpush.msra.mxu0 %v783
    %1293 = vmatmul.f32.gmra.mxu0 %v1275
    %v1294 = vpop.f32.mrf.mxu0
    %v1295 = vadd.f32 0.0, %v1294
    %1296 = vdwg.mxu0
    %v1298 = vsel %vm842, %v1175, 0
    %1300 = vmatpush.msra.mxu0 0.0
    %1301 = vmatpush.msra.mxu0 0.0
    %1302 = vmatpush.msra.mxu0 0.0
    %1303 = vmatpush.msra.mxu0 0.0
    %1304 = vmatpush.msra.mxu0 0.0
    %1305 = vmatpush.msra.mxu0 0.0
    %1306 = vmatpush.msra.mxu0 0.0
    %1307 = vmatpush.msra.mxu0 0.0
    %1308 = vmatpush.msra.mxu0 0.0
    %1309 = vmatpush.msra.mxu0 0.0
    %1310 = vmatpush.msra.mxu0 0.0
    %1311 = vmatpush.msra.mxu0 0.0
    %1312 = vmatpush.msra.mxu0 0.0
    %1313 = vmatpush.msra.mxu0 0.0
    %1314 = vmatpush.msra.mxu0 0.0
    %1315 = vmatpush.msra.mxu0 %v785
    %1316 = vmatmul.f32.gmra.mxu0 %v1298
    %v1317 = vpop.f32.mrf.mxu0
    %v1318 = vadd.f32 0.0, %v1317
    %1319 = vdwg.mxu0
    %v1321 = vsel %vm842, %v1190, 0
    %1323 = vmatpush.msra.mxu0 0.0
    %1324 = vmatpush.msra.mxu0 0.0
    %1325 = vmatpush.msra.mxu0 0.0
    %1326 = vmatpush.msra.mxu0 0.0
    %1327 = vmatpush.msra.mxu0 0.0
    %1328 = vmatpush.msra.mxu0 0.0
    %1329 = vmatpush.msra.mxu0 0.0
    %1330 = vmatpush.msra.mxu0 0.0
    %1331 = vmatpush.msra.mxu0 0.0
    %1332 = vmatpush.msra.mxu0 0.0
    %1333 = vmatpush.msra.mxu0 0.0
    %1334 = vmatpush.msra.mxu0 0.0
    %1335 = vmatpush.msra.mxu0 0.0
    %1336 = vmatpush.msra.mxu0 0.0
    %1337 = vmatpush.msra.mxu0 0.0
    %1338 = vmatpush.msra.mxu0 %v787
    %1339 = vmatmul.f32.gmra.mxu0 %v1321
    %v1340 = vpop.f32.mrf.mxu0
    %v1341 = vadd.f32 0.0, %v1340
    %1342 = vdwg.mxu0
    %v1344 = vsel %vm842, %v1205, 0
    %1346 = vmatpush.msra.mxu0 0.0
    %1347 = vmatpush.msra.mxu0 0.0
    %1348 = vmatpush.msra.mxu0 0.0
    %1349 = vmatpush.msra.mxu0 0.0
    %1350 = vmatpush.msra.mxu0 0.0
    %1351 = vmatpush.msra.mxu0 0.0
    %1352 = vmatpush.msra.mxu0 0.0
    %1353 = vmatpush.msra.mxu0 0.0
    %1354 = vmatpush.msra.mxu0 0.0
    %1355 = vmatpush.msra.mxu0 0.0
    %1356 = vmatpush.msra.mxu0 0.0
    %1357 = vmatpush.msra.mxu0 0.0
    %1358 = vmatpush.msra.mxu0 0.0
    %1359 = vmatpush.msra.mxu0 0.0
    %1360 = vmatpush.msra.mxu0 0.0
    %1361 = vmatpush.msra.mxu0 %v835
    %1362 = vmatmul.f32.gmra.mxu0 %v1344
    %v1363 = vpop.f32.mrf.mxu0
    %v1364 = vadd.f32 0.0, %v1363
    %1365 = vdwg.mxu0
    %v1367 = vsel %vm842, %v1220, 0
    %1369 = vmatpush.msra.mxu0 0.0
    %1370 = vmatpush.msra.mxu0 0.0
    %1371 = vmatpush.msra.mxu0 0.0
    %1372 = vmatpush.msra.mxu0 0.0
    %1373 = vmatpush.msra.mxu0 0.0
    %1374 = vmatpush.msra.mxu0 0.0
    %1375 = vmatpush.msra.mxu0 0.0
    %1376 = vmatpush.msra.mxu0 0.0
    %1377 = vmatpush.msra.mxu0 0.0
    %1378 = vmatpush.msra.mxu0 0.0
    %1379 = vmatpush.msra.mxu0 0.0
    %1380 = vmatpush.msra.mxu0 0.0
    %1381 = vmatpush.msra.mxu0 0.0
    %1382 = vmatpush.msra.mxu0 0.0
    %1383 = vmatpush.msra.mxu0 0.0
    %1384 = vmatpush.msra.mxu0 %v837
    %1385 = vmatmul.f32.gmra.mxu0 %v1367
    %v1386 = vpop.f32.mrf.mxu0
    %v1387 = vadd.f32 0.0, %v1386
    %1388 = vdwg.mxu0
    %v1390 = vsel %vm842, %v1235, 0
    %1392 = vmatpush.msra.mxu0 0.0
    %1393 = vmatpush.msra.mxu0 0.0
    %1394 = vmatpush.msra.mxu0 0.0
    %1395 = vmatpush.msra.mxu0 0.0
    %1396 = vmatpush.msra.mxu0 0.0
    %1397 = vmatpush.msra.mxu0 0.0
    %1398 = vmatpush.msra.mxu0 0.0
    %1399 = vmatpush.msra.mxu0 0.0
    %1400 = vmatpush.msra.mxu0 0.0
    %1401 = vmatpush.msra.mxu0 0.0
    %1402 = vmatpush.msra.mxu0 0.0
    %1403 = vmatpush.msra.mxu0 0.0
    %1404 = vmatpush.msra.mxu0 0.0
    %1405 = vmatpush.msra.mxu0 0.0
    %1406 = vmatpush.msra.mxu0 0.0
    %1407 = vmatpush.msra.mxu0 %v839
    %1408 = vmatmul.f32.gmra.mxu0 %v1390
    %v1409 = vpop.f32.mrf.mxu0
    %v1410 = vadd.f32 0.0, %v1409
    %1411 = vdwg.mxu0
    %v1413 = vsel %vm842, %v1250, 0
    %1415 = vmatpush.msra.mxu0 0.0
    %1416 = vmatpush.msra.mxu0 0.0
    %1417 = vmatpush.msra.mxu0 0.0
    %1418 = vmatpush.msra.mxu0 0.0
    %1419 = vmatpush.msra.mxu0 0.0
    %1420 = vmatpush.msra.mxu0 0.0
    %1421 = vmatpush.msra.mxu0 0.0
    %1422 = vmatpush.msra.mxu0 0.0
    %1423 = vmatpush.msra.mxu0 0.0
    %1424 = vmatpush.msra.mxu0 0.0
    %1425 = vmatpush.msra.mxu0 0.0
    %1426 = vmatpush.msra.mxu0 0.0
    %1427 = vmatpush.msra.mxu0 0.0
    %1428 = vmatpush.msra.mxu0 0.0
    %1429 = vmatpush.msra.mxu0 0.0
    %1430 = vmatpush.msra.mxu0 %v841
    %1431 = vmatmul.f32.gmra.mxu0 %v1413
    %v1432 = vpop.f32.mrf.mxu0
    %v1433 = vadd.f32 0.0, %v1432
    %1434 = vdwg.mxu0
    %v1435 = vrot.slane %v1318, 4
    %v1436 = vsel %vm134, %v1435, %v1272
    %v1437 = vrot.slane %v1272, 4
    %v1438 = vsel %vm134, %v1318, %v1437
    %v1440 = vunpack.c.l.s4 1983009808
    %v1441 = vunpack.c.0.s8 %v1440
    %v1442 = vperm.slane %v1436, %v1441
    %v1444 = vunpack.c.l.s4 1983009808
    %v1445 = vunpack.c.0.s8 %v1444
    %v1446 = vperm.slane %v1438, %v1445
    %v1447 = vrot.slane %v1341, 4
    %v1448 = vsel %vm134, %v1447, %v1295
    %v1449 = vrot.slane %v1295, 4
    %v1450 = vsel %vm134, %v1341, %v1449
    %v1452 = vunpack.c.l.s4 1983009808
    %v1453 = vunpack.c.0.s8 %v1452
    %v1454 = vperm.slane %v1448, %v1453
    %v1456 = vunpack.c.l.s4 1983009808
    %v1457 = vunpack.c.0.s8 %v1456
    %v1458 = vperm.slane %v1450, %v1457
    %v1459 = vrot.slane %v1454, 4
    %v1460 = vsel %vm134, %v1459, %v1442
    %v1461 = vrot.slane %v1442, 4
    %v1462 = vsel %vm134, %v1454, %v1461
    %v1464 = vunpack.c.l.s4 1934713408
    %v1465 = vunpack.c.0.s8 %v1464
    %v1466 = vperm.slane %v1460, %v1465
    %v1468 = vunpack.c.l.s4 1934713408
    %v1469 = vunpack.c.0.s8 %v1468
    %v1470 = vperm.slane %v1462, %v1469
    %v1471 = vrot.slane %v1458, 4
    %v1472 = vsel %vm134, %v1471, %v1446
    %v1473 = vrot.slane %v1446, 4
    %v1474 = vsel %vm134, %v1458, %v1473
    %v1476 = vunpack.c.l.s4 1934713408
    %v1477 = vunpack.c.0.s8 %v1476
    %v1478 = vperm.slane %v1472, %v1477
    %v1480 = vunpack.c.l.s4 1934713408
    %v1481 = vunpack.c.0.s8 %v1480
    %v1482 = vperm.slane %v1474, %v1481
    %v1483 = vrot.slane %v1466, 4
    %v1484 = vsel %vm134, 0.0, %v1483
    %v1485 = vrot.slane %v1470, 4
    %v1486 = vsel %vm134, 0.0, %v1485
    %v1487 = vrot.slane %v1478, 4
    %v1488 = vsel %vm134, 0.0, %v1487
    %v1489 = vrot.slane %v1482, 4
    %v1490 = vsel %vm134, 0.0, %v1489
    %v1491 = vrot.slane %v1410, 4
    %v1492 = vsel %vm134, %v1491, %v1364
    %v1493 = vrot.slane %v1364, 4
    %v1494 = vsel %vm134, %v1410, %v1493
    %v1496 = vunpack.c.l.s4 1983009808
    %v1497 = vunpack.c.0.s8 %v1496
    %v1498 = vperm.slane %v1492, %v1497
    %v1500 = vunpack.c.l.s4 1983009808
    %v1501 = vunpack.c.0.s8 %v1500
    %v1502 = vperm.slane %v1494, %v1501
    %v1503 = vrot.slane %v1433, 4
    %v1504 = vsel %vm134, %v1503, %v1387
    %v1505 = vrot.slane %v1387, 4
    %v1506 = vsel %vm134, %v1433, %v1505
    %v1508 = vunpack.c.l.s4 1983009808
    %v1509 = vunpack.c.0.s8 %v1508
    %v1510 = vperm.slane %v1504, %v1509
    %v1512 = vunpack.c.l.s4 1983009808
    %v1513 = vunpack.c.0.s8 %v1512
    %v1514 = vperm.slane %v1506, %v1513
    %v1515 = vrot.slane %v1510, 4
    %v1516 = vsel %vm134, %v1515, %v1498
    %v1517 = vrot.slane %v1498, 4
    %v1518 = vsel %vm134, %v1510, %v1517
    %v1520 = vunpack.c.l.s4 1934713408
    %v1521 = vunpack.c.0.s8 %v1520
    %v1522 = vperm.slane %v1516, %v1521
    %v1524 = vunpack.c.l.s4 1934713408
    %v1525 = vunpack.c.0.s8 %v1524
    %v1526 = vperm.slane %v1518, %v1525
    %v1527 = vrot.slane %v1514, 4
    %v1528 = vsel %vm134, %v1527, %v1502
    %v1529 = vrot.slane %v1502, 4
    %v1530 = vsel %vm134, %v1514, %v1529
    %v1532 = vunpack.c.l.s4 1934713408
    %v1533 = vunpack.c.0.s8 %v1532
    %v1534 = vperm.slane %v1528, %v1533
    %v1536 = vunpack.c.l.s4 1934713408
    %v1537 = vunpack.c.0.s8 %v1536
    %v1538 = vperm.slane %v1530, %v1537
    %v1539 = vrot.slane %v1522, 4
    %v1540 = vsel %vm134, 0.0, %v1539
    %v1541 = vrot.slane %v1526, 4
    %v1542 = vsel %vm134, 0.0, %v1541
    %v1543 = vrot.slane %v1534, 4
    %v1544 = vsel %vm134, 0.0, %v1543
    %v1545 = vrot.slane %v1538, 4
    %v1546 = vsel %vm134, 0.0, %v1545
    %v1547 = vsel %vm134, %v1485, %v1466
    %v1549 = vunpack.c.l.s4 1983009808
    %v1550 = vunpack.c.0.s8 %v1549
    %v1551 = vperm.slane %v1547, %v1550
    %v1552 = vrot.slane %v1486, 4
    %v1553 = vsel %vm134, %v1552, %v1484
    %v1555 = vunpack.c.l.s4 1983009808
    %v1556 = vunpack.c.0.s8 %v1555
    %v1557 = vperm.slane %v1553, %v1556
    %v1558 = vsel %vm134, %v1489, %v1478
    %v1560 = vunpack.c.l.s4 1983009808
    %v1561 = vunpack.c.0.s8 %v1560
    %v1562 = vperm.slane %v1558, %v1561
    %v1563 = vrot.slane %v1490, 4
    %v1564 = vsel %vm134, %v1563, %v1488
    %v1566 = vunpack.c.l.s4 1983009808
    %v1567 = vunpack.c.0.s8 %v1566
    %v1568 = vperm.slane %v1564, %v1567
    %v1569 = vrot.slane %v1557, 4
    %v1570 = vsel %vm134, %v1569, %v1551
    %v1571 = vrot.slane %v1551, 4
    %v1572 = vsel %vm134, %v1557, %v1571
    %v1574 = vunpack.c.l.s4 1934713408
    %v1575 = vunpack.c.0.s8 %v1574
    %v1576 = vperm.slane %v1570, %v1575
    %v1578 = vunpack.c.l.s4 1934713408
    %v1579 = vunpack.c.0.s8 %v1578
    %v1580 = vperm.slane %v1572, %v1579
    %v1581 = vrot.slane %v1568, 4
    %v1582 = vsel %vm134, %v1581, %v1562
    %v1583 = vrot.slane %v1562, 4
    %v1584 = vsel %vm134, %v1568, %v1583
    %v1586 = vunpack.c.l.s4 1934713408
    %v1587 = vunpack.c.0.s8 %v1586
    %v1588 = vperm.slane %v1582, %v1587
    %v1590 = vunpack.c.l.s4 1934713408
    %v1591 = vunpack.c.0.s8 %v1590
    %v1592 = vperm.slane %v1584, %v1591
    %v1593 = vrot.slane %v1588, 4
    %v1594 = vsel %vm134, %v1593, %v1576
    %v1595 = vrot.slane %v1576, 4
    %v1596 = vsel %vm134, %v1588, %v1595
    %v1597 = vrot.slane %v1592, 4
    %v1598 = vsel %vm134, %v1597, %v1580
    %v1599 = vrot.slane %v1580, 4
    %v1600 = vsel %vm134, %v1592, %v1599
    %v1601 = vsel %vm134, %v1541, %v1522
    %v1603 = vunpack.c.l.s4 1983009808
    %v1604 = vunpack.c.0.s8 %v1603
    %v1605 = vperm.slane %v1601, %v1604
    %v1606 = vrot.slane %v1542, 4
    %v1607 = vsel %vm134, %v1606, %v1540
    %v1609 = vunpack.c.l.s4 1983009808
    %v1610 = vunpack.c.0.s8 %v1609
    %v1611 = vperm.slane %v1607, %v1610
    %v1612 = vsel %vm134, %v1545, %v1534
    %v1614 = vunpack.c.l.s4 1983009808
    %v1615 = vunpack.c.0.s8 %v1614
    %v1616 = vperm.slane %v1612, %v1615
    %v1617 = vrot.slane %v1546, 4
    %v1618 = vsel %vm134, %v1617, %v1544
    %v1620 = vunpack.c.l.s4 1983009808
    %v1621 = vunpack.c.0.s8 %v1620
    %v1622 = vperm.slane %v1618, %v1621
    %v1623 = vrot.slane %v1611, 4
    %v1624 = vsel %vm134, %v1623, %v1605
    %v1625 = vrot.slane %v1605, 4
    %v1626 = vsel %vm134, %v1611, %v1625
    %v1628 = vunpack.c.l.s4 1934713408
    %v1629 = vunpack.c.0.s8 %v1628
    %v1630 = vperm.slane %v1624, %v1629
    %v1632 = vunpack.c.l.s4 1934713408
    %v1633 = vunpack.c.0.s8 %v1632
    %v1634 = vperm.slane %v1626, %v1633
    %v1635 = vrot.slane %v1622, 4
    %v1636 = vsel %vm134, %v1635, %v1616
    %v1637 = vrot.slane %v1616, 4
    %v1638 = vsel %vm134, %v1622, %v1637
    %v1640 = vunpack.c.l.s4 1934713408
    %v1641 = vunpack.c.0.s8 %v1640
    %v1642 = vperm.slane %v1636, %v1641
    %v1644 = vunpack.c.l.s4 1934713408
    %v1645 = vunpack.c.0.s8 %v1644
    %v1646 = vperm.slane %v1638, %v1645
    %v1647 = vrot.slane %v1642, 4
    %v1648 = vsel %vm134, %v1647, %v1630
    %v1649 = vrot.slane %v1630, 4
    %v1650 = vsel %vm134, %v1642, %v1649
    %v1651 = vrot.slane %v1646, 4
    %v1652 = vsel %vm134, %v1651, %v1634
    %v1653 = vrot.slane %v1634, 4
    %v1654 = vsel %vm134, %v1646, %v1653
    %1657 = vrot.lane.b32.xlu0 %v1596, 8
    %v1658 = vpop.permute.xlu0 %1657
    %1659 = vrot.lane.b32.xlu0 %v1650, 8
    %v1660 = vpop.permute.xlu0 %1659
    %1665 = vrot.lane.b32.xlu0 %v1598, 16
    %v1666 = vpop.permute.xlu0 %1665
    %1667 = vrot.lane.b32.xlu0 %v1652, 16
    %v1668 = vpop.permute.xlu0 %1667
    %1673 = vrot.lane.b32.xlu0 %v1600, 24
    %v1674 = vpop.permute.xlu0 %1673
    %1675 = vrot.lane.b32.xlu0 %v1654, 24
    %v1676 = vpop.permute.xlu0 %1675
    %v1679 = vsel %vm842, %v1594, %v1658
    %v1680 = vsel %vm842, %v1648, %v1660
    %vm1681 = vcmask 130048
    %v1682 = vsel %vm1681, %v1679, %v1666
    %v1683 = vsel %vm1681, %v1680, %v1668
    %vm1684 = vcmask 195584
    %v1685 = vsel %vm1684, %v1682, %v1674
    %v1686 = vsel %vm1684, %v1683, %v1676
    %v1687 = vld [vmem:[%s1] sm:$0xff]
    %v1688 = vld [vmem:[%s1 + $0x8] sm:$0xff]
    %v1689 = vld [vmem:[%s1 + $0x10] sm:$0xff]
    %v1690 = vld [vmem:[%s1 + $0x18] sm:$0xff]
    %v1691 = vperm.slane %v24, 0
    %1696 = vrot.lane.b32.xlu0 %v1687, 32
    %v1697 = vpop.permute.xlu0 %1696
    %1698 = vrot.lane.b32.xlu0 %v1688, 32
    %v1699 = vpop.permute.xlu0 %1698
    %1700 = vrot.lane.b32.xlu0 %v1689, 32
    %v1701 = vpop.permute.xlu0 %1700
    %1702 = vrot.lane.b32.xlu0 %v1690, 32
    %v1703 = vpop.permute.xlu0 %1702
    %v1709 = vsel %vm27, %v1685, 0
    %v1712 = vsel %vm27, %v1686, 0
    %1714 = vmatpush.msra.mxu0 0.0
    %1715 = vmatpush.msra.mxu0 0.0
    %1716 = vmatpush.msra.mxu0 0.0
    %1717 = vmatpush.msra.mxu0 0.0
    %1718 = vmatpush.msra.mxu0 0.0
    %1719 = vmatpush.msra.mxu0 0.0
    %1720 = vmatpush.msra.mxu0 0.0
    %1721 = vmatpush.msra.mxu0 0.0
    %1722 = vmatpush.msra.mxu0 0.0
    %1723 = vmatpush.msra.mxu0 0.0
    %1724 = vmatpush.msra.mxu0 0.0
    %1725 = vmatpush.msra.mxu0 0.0
    %1726 = vmatpush.msra.mxu0 %v1703
    %1727 = vmatpush.msra.mxu0 %v1701
    %1728 = vmatpush.msra.mxu0 %v1699
    %1729 = vmatpush.msra.mxu0 %v1697
    %1730 = vmatmul.f32.gmra.mxu0 %v1709
    %v1731 = vpop.f32.mrf.mxu0
    %v1732 = vadd.f32 %v1691, %v1731
    %1733 = vmatmul.f32.gmra.mxu0 %v1712
    %v1734 = vpop.f32.mrf.mxu0
    %v1735 = vadd.f32 %v1691, %v1734
    %1736 = vdwg.mxu0
    %v1737 = vadd.f32 %v21, %v1732
    %v1738 = vadd.f32 %v22, %v1735
    %v1739 = vsel %vm27, %v1737, 0.0
    %1740 = vadd.xlane.f32.xlu0 %v1739
    %v1741 = vpop.xlane.xlu0 %1740
    %v1742 = vsel %vm27, %v1738, 0.0
    %1743 = vadd.xlane.f32.xlu0 %v1742
    %v1744 = vpop.xlane.xlu0 %1743
    %v1745 = vmul.f32 %v1741, %v40
    %v1746 = vmul.f32 %v1744, %v40
    %v1747 = vsub.f32 %v1737, %v1745
    %v1748 = vsub.f32 %v1738, %v1746
    %v1749 = vmul.f32 %v1747, %v1747
    %v1750 = vmul.f32 %v1748, %v1748
    %v1751 = vsel %vm27, %v1749, 0.0
    %1752 = vadd.xlane.f32.xlu0 %v1751
    %v1753 = vpop.xlane.xlu0 %1752
    %v1754 = vsel %vm27, %v1750, 0.0
    %1755 = vadd.xlane.f32.xlu0 %v1754
    %v1756 = vpop.xlane.xlu0 %1755
    %v1757 = vmul.f32 %v1753, %v40
    %v1758 = vmul.f32 %v1756, %v40
    %v1759 = vadd.f32 %v1757, 1e-05
    %v1760 = vadd.f32 %v1758, 1e-05
    %v1761 = vrsqrt.pop %v1759
    %v1762 = vmul.f32 %v1761, %v1759
    %v1763 = vmul.f32 %v1762, %v1761
    %v1764 = vmul.f32 0.5, %v1763
    %v1765 = vsub.f32 1.5, %v1764
    %v1766 = vmul.f32 %v1761, %v1765
    %vm1767 = vweird.f32 %v1759
    %vm1768 = vweird.f32 %v1761
    %vm1769 = vmor %vm1767, %vm1768
    %v1770 = vsel %vm1769, %v1761, %v1766
    %v1771 = vrsqrt.pop %v1760
    %v1772 = vmul.f32 %v1771, %v1760
    %v1773 = vmul.f32 %v1772, %v1771
    %v1774 = vmul.f32 0.5, %v1773
    %v1775 = vsub.f32 1.5, %v1774
    %v1776 = vmul.f32 %v1771, %v1775
    %vm1777 = vweird.f32 %v1760
    %vm1778 = vweird.f32 %v1771
    %vm1779 = vmor %vm1777, %vm1778
    %v1780 = vsel %vm1779, %v1771, %v1776
    %v1781 = vmul.f32 %v1747, %v1770
    %v1782 = vmul.f32 %v1748, %v1780
    %v1783 = vld [vmem:[%s2] sm:$0xff]
    %v1784 = vld [vmem:[%s2 + $0x8] sm:$0xff]
    %v1785 = vld [vmem:[%s2 + $0x10] sm:$0xff]
    %v1786 = vld [vmem:[%s2 + $0x18] sm:$0xff]
    %v1787 = vperm.slane %v25, 0
    %v1789 = vsel %vm27, %v1781, 0
    %v1792 = vsel %vm27, %v1782, 0
    %1794 = vmatpush.msra.mxu0 0.0
    %1795 = vmatpush.msra.mxu0 0.0
    %1796 = vmatpush.msra.mxu0 0.0
    %1797 = vmatpush.msra.mxu0 0.0
    %1798 = vmatpush.msra.mxu0 0.0
    %1799 = vmatpush.msra.mxu0 0.0
    %1800 = vmatpush.msra.mxu0 0.0
    %1801 = vmatpush.msra.mxu0 0.0
    %1802 = vmatpush.msra.mxu0 0.0
    %1803 = vmatpush.msra.mxu0 0.0
    %1804 = vmatpush.msra.mxu0 0.0
    %1805 = vmatpush.msra.mxu0 0.0
    %1806 = vmatpush.msra.mxu0 %v1786
    %1807 = vmatpush.msra.mxu0 %v1785
    %1808 = vmatpush.msra.mxu0 %v1784
    %1809 = vmatpush.msra.mxu0 %v1783
    %1810 = vmatmul.f32.gmra.mxu0 %v1789
    %v1811 = vpop.f32.mrf.mxu0
    %v1812 = vadd.f32 %v1787, %v1811
    %1813 = vmatmul.f32.gmra.mxu0 %v1792
    %v1814 = vpop.f32.mrf.mxu0
    %v1815 = vadd.f32 %v1787, %v1814
    %1816 = vdwg.mxu0
    %v1817 = vmul.f32 %v1812, 0.5
    %v1818 = vmul.f32 %v1815, 0.5
    %v1819 = vmul.f32 %v1812, 0.70710677
    %v1820 = vmul.f32 %v1815, 0.70710677
    %v1821 = vmul.f32 %v1819, %v1819
    %v1822 = vmin.f32 16.0, %v1821
    %v1823 = vmul.f32 %v1822, 2.1237322e-06
    %v1824 = vadd.f32 %v1823, 0.00028619796
    %v1825 = vmul.f32 %v1822, %v1824
    %v1826 = vadd.f32 %v1825, 0.0036580483
    %v1827 = vmul.f32 %v1822, %v1826
    %v1828 = vadd.f32 %v1827, 0.05243302
    %v1829 = vmul.f32 %v1822, %v1828
    %v1830 = vadd.f32 %v1829, 0.18741608
    %v1831 = vmul.f32 %v1822, %v1830
    %v1832 = vadd.f32 %v1831, 1.1283791
    %v1833 = vmul.f32 %v1819, %v1832
    %v1834 = vmul.f32 %v1822, 3.8918573e-05
    %v1835 = vadd.f32 %v1834, 0.001143296
    %v1836 = vmul.f32 %v1822, %v1835
    %v1837 = vadd.f32 %v1836, 0.014752088
    %v1838 = vmul.f32 %v1822, %v1837
    %v1839 = vadd.f32 %v1838, 0.112945676
    %v1840 = vmul.f32 %v1822, %v1839
    %v1841 = vadd.f32 %v1840, 0.4994258
    %v1842 = vmul.f32 %v1822, %v1841
    %v1843 = vadd.f32 %v1842, 1.0
    %v1844 = vrcp.pop %v1843
    %v1845 = vmul.f32 %v1843, %v1844
    %v1846 = vsub.f32 1.0, %v1845
    %v1847 = vmul.f32 %v1844, %v1846
    %v1848 = vadd.f32 %v1844, %v1847
    %vm1849 = vweird.f32 %v1843
    %vm1850 = vweird.f32 %v1844
    %vm1851 = vmor %vm1849, %vm1850
    %v1852 = vsel %vm1851, %v1844, %v1848
    %v1853 = vand.u32 2147483647, %v1843
    %vm1854 = vcmp.eq.f32.partialorder %v1853, 8.507059e+37
    %v1855 = vand.u32 %v1843, 2147483648
    %v1856 = vor.u32 1.1754944e-38, %v1855
    %v1857 = vsel %vm1854, %v1856, %v1852
    %v1858 = vmul.f32 %v1833, %v1857
    %v1859 = vmin.f32 %v1858, 1.0
    %v1860 = vmax.f32 %v1859, -1.0
    %v1861 = vmul.f32 %v1820, %v1820
    %v1862 = vmin.f32 16.0, %v1861
    %v1863 = vmul.f32 %v1862, 2.1237322e-06
    %v1864 = vadd.f32 %v1863, 0.00028619796
    %v1865 = vmul.f32 %v1862, %v1864
    %v1866 = vadd.f32 %v1865, 0.0036580483
    %v1867 = vmul.f32 %v1862, %v1866
    %v1868 = vadd.f32 %v1867, 0.05243302
    %v1869 = vmul.f32 %v1862, %v1868
    %v1870 = vadd.f32 %v1869, 0.18741608
    %v1871 = vmul.f32 %v1862, %v1870
    %v1872 = vadd.f32 %v1871, 1.1283791
    %v1873 = vmul.f32 %v1820, %v1872
    %v1874 = vmul.f32 %v1862, 3.8918573e-05
    %v1875 = vadd.f32 %v1874, 0.001143296
    %v1876 = vmul.f32 %v1862, %v1875
    %v1877 = vadd.f32 %v1876, 0.014752088
    %v1878 = vmul.f32 %v1862, %v1877
    %v1879 = vadd.f32 %v1878, 0.112945676
    %v1880 = vmul.f32 %v1862, %v1879
    %v1881 = vadd.f32 %v1880, 0.4994258
    %v1882 = vmul.f32 %v1862, %v1881
    %v1883 = vadd.f32 %v1882, 1.0
    %v1884 = vrcp.pop %v1883
    %v1885 = vmul.f32 %v1883, %v1884
    %v1886 = vsub.f32 1.0, %v1885
    %v1887 = vmul.f32 %v1884, %v1886
    %v1888 = vadd.f32 %v1884, %v1887
    %vm1889 = vweird.f32 %v1883
    %vm1890 = vweird.f32 %v1884
    %vm1891 = vmor %vm1889, %vm1890
    %v1892 = vsel %vm1891, %v1884, %v1888
    %v1893 = vand.u32 2147483647, %v1883
    %vm1894 = vcmp.eq.f32.partialorder %v1893, 8.507059e+37
    %v1895 = vand.u32 %v1883, 2147483648
    %v1896 = vor.u32 1.1754944e-38, %v1895
    %v1897 = vsel %vm1894, %v1896, %v1892
    %v1898 = vmul.f32 %v1873, %v1897
    %v1899 = vmin.f32 %v1898, 1.0
    %v1900 = vmax.f32 %v1899, -1.0
    %v1901 = vadd.f32 %v1860, 1.0
    %v1902 = vadd.f32 %v1900, 1.0
    %v1903 = vmul.f32 %v1817, %v1901
    %v1904 = vmul.f32 %v1818, %v1902
    %v1905 = vld [vmem:[%s3] sm:$0xff]
    %v1906 = vld [vmem:[%s3 + $0x8] sm:$0xff]
    %v1907 = vld [vmem:[%s3 + $0x10] sm:$0xff]
    %v1908 = vld [vmem:[%s3 + $0x18] sm:$0xff]
    %v1909 = vld [vmem:[%s3 + $0x20] sm:$0xff]
    %v1910 = vld [vmem:[%s3 + $0x28] sm:$0xff]
    %v1911 = vld [vmem:[%s3 + $0x30] sm:$0xff]
    %v1912 = vld [vmem:[%s3 + $0x38] sm:$0xff]
    %v1913 = vperm.slane %v26, 0
    %vm1914 = vcmask 523264
    %v1916 = vsel %vm1914, %v1903, 0
    %v1919 = vsel %vm1914, %v1904, 0
    %1921 = vmatpush.msra.mxu0 0.0
    %1922 = vmatpush.msra.mxu0 0.0
    %1923 = vmatpush.msra.mxu0 0.0
    %1924 = vmatpush.msra.mxu0 0.0
    %1925 = vmatpush.msra.mxu0 0.0
    %1926 = vmatpush.msra.mxu0 0.0
    %1927 = vmatpush.msra.mxu0 0.0
    %1928 = vmatpush.msra.mxu0 0.0
    %1929 = vmatpush.msra.mxu0 %v1912
    %1930 = vmatpush.msra.mxu0 %v1911
    %1931 = vmatpush.msra.mxu0 %v1910
    %1932 = vmatpush.msra.mxu0 %v1909
    %1933 = vmatpush.msra.mxu0 %v1908
    %1934 = vmatpush.msra.mxu0 %v1907
    %1935 = vmatpush.msra.mxu0 %v1906
    %1936 = vmatpush.msra.mxu0 %v1905
    %1937 = vmatmul.f32.gmra.mxu0 %v1916
    %v1938 = vpop.f32.mrf.mxu0
    %v1939 = vadd.f32 %v1913, %v1938
    %1940 = vmatmul.f32.gmra.mxu0 %v1919
    %v1941 = vpop.f32.mrf.mxu0
    %v1942 = vadd.f32 %v1913, %v1941
    %1943 = vdwg.mxu0
    %v1944 = vadd.f32 %v1737, %v1939
    %v1945 = vadd.f32 %v1738, %v1942
    %1946 = vst.msk [vmem:[#allocation2] sm:$0xff] %vm27, %v1944
    %1947 = vst.msk [vmem:[#allocation2 + $0x8] sm:$0xff] %vm27, %v1945
    // Predicated region
    $region22: #{transformer_block.1} parent=1 // pred_check
      _
    $region23: #{transformer_block.1} parent=1 // pred_check_branch
      %1949 = sbr.rel (0) target = $region25
    $region24: #{transformer_block.1} parent=1 // pred_region
      %1951 = vsyncadd [#allocation3], 0
      %s1952 = sshll.u32 [#allocation2], 4
      %s1953 = int_to_ptr.vmem [resolvable:$true] %s1952
      %s1954 = sshll.u32 %s5, 4
      %s1955 = int_to_ptr.hbm [resolvable:$true] %s1954
      %1960 = dma.vmem_to_hbm [thread:$0]  %s1953, 256, %s1955, [#allocation3], 128, 128, 8
    $region25: #{transformer_block.1} parent=1 // pred_fallthru
      _
    // Predicated region
    $region26: #{transformer_block.1} parent=1 // pred_check
      _
    $region27: #{transformer_block.1} parent=1 // pred_check_branch
      %1962 = sbr.rel (0) target = $region29
    $region28: #{transformer_block.1} parent=1 // pred_region
      %1964 = dma.done [#allocation3], 256
    $region29: #{transformer_block.1} parent=1 // pred_fallthru
      _
    %1965 = vsyncpa [#allocation3], 1

</llo_original>
